<compile_context>
chip_gen: v7x
topology: tpu7x:2x2x1
jax: 0.10.0
libtpu: 0.0.40
codegen_flags: <defaults>
</compile_context>

<pallas_src>
import functools

import jax
import jax.numpy as jnp
from jax.experimental import pallas as pl
from jax.experimental.pallas import tpu as pltpu


# ----------------------------- Pallas kernel -------------------------------

def _fused_cnn_kernel(p_ref, cw_ref, cb_ref, fw_ref, fb_ref, o_ref, *, f_pad):
    # p_ref : [C*k*k, 144]        patches of one image (K on sublanes, 144 on lanes)
    # cw_ref: [F_pad, C*k*k]      padded conv weight
    # cb_ref: [F_pad, 1]          padded conv bias
    # fw_ref: [F_pad, 144, N_pad] padded FC weight, fw[f, p, n] = fc_w[n, f*144 + p]
    # fb_ref: [1, N_pad]          padded FC bias (padded classes = -1e30)
    # o_ref : [1, N_pad]          log-probabilities (lane-dense store)

    # Conv as matmul; output [F_pad, 144] is directly in NCHW flatten order.
    act = jnp.dot(cw_ref[...], p_ref[...], preferred_element_type=jnp.float32)
    act = jnp.maximum(act + cb_ref[...], 0.0)                 # [F_pad, 144]

    # FC: logits[n] = fc_b[n] + sum_f sum_p act[f, p] * fw[f, p, n]
    # (small static loop over padded filters; each term is a [1,144]@[144,N_pad]
    #  MXU pass, so no in-kernel relayout/flatten of `act` is needed)
    logits = fb_ref[...]                                      # [1, N_pad]
    for f in range(f_pad):
        logits = logits + jnp.dot(act[f:f + 1, :], fw_ref[f],
                                  preferred_element_type=jnp.float32)

    # Numerically-stable log_softmax. Padded classes carry a -1e30 bias so they
    # never win the max and contribute ~0 to the sum.
    m = jnp.max(logits, axis=-1, keepdims=True)
    shifted = logits - m
    lse = jnp.log(jnp.sum(jnp.exp(shifted), axis=-1, keepdims=True))
    o_ref[...] = (shifted - lse).astype(o_ref.dtype)


# ------------------------------- wrapper ------------------------------------

@functools.partial(jax.jit, static_argnames=("num_filters", "num_classes"))
def simple_cnn1layer_forward(x, conv_w, conv_b, fc_w, fc_b,
                             num_filters, num_classes):
    # x: [B, 3, 32, 32] float32 (NCHW, same as PyTorch)
    B, C, H, W = x.shape
    k, s = 10, 2
    OH = (H - k) // s + 1
    OW = (W - k) // s + 1
    P = OH * OW                      # 144
    KC = C * k * k                   # 300

    F_PAD = ((num_filters + 7) // 8) * 8          # pad filters to sublane width
    N_PAD = ((num_classes + 127) // 128) * 128    # pad classes to lane width

    # Patch extraction as one XLA op (no Python slice loop). Output channel
    # order is (c, kh, kw) with c slowest -> matches conv_w.reshape(F, C*k*k).
    # TODO(synk): move patch extraction fully in-kernel to avoid materializing
    # the [B, 300, 144] patch matrix in HBM.
    patches = jax.lax.conv_general_dilated_patches(
        x, (k, k), (s, s), padding="VALID")       # [B, C*k*k, OH, OW]
    patches = patches.reshape(B, KC, P)           # [B, 300, 144]

    # Padded parameters (zero weights, zero conv bias, -1e30 FC bias for pads).
    cw = jnp.zeros((F_PAD, KC), jnp.float32).at[:num_filters].set(
        conv_w.reshape(num_filters, KC))
    cb = jnp.zeros((F_PAD, 1), jnp.float32).at[:num_filters, 0].set(conv_b)
    fw = jnp.zeros((F_PAD, P, N_PAD), jnp.float32).at[
        :num_filters, :, :num_classes].set(
        jnp.transpose(fc_w.reshape(num_classes, num_filters, P), (1, 2, 0)))
    fb = jnp.full((1, N_PAD), -1e30, jnp.float32).at[0, :num_classes].set(fc_b)

    kernel = functools.partial(_fused_cnn_kernel, f_pad=F_PAD)

    out = pl.pallas_call(
        kernel,
        out_shape=jax.ShapeDtypeStruct((B, 1, N_PAD), jnp.float32),
        grid_spec=pltpu.PrefetchScalarGridSpec(
            num_scalar_prefetch=0,
            grid=(B,),
            in_specs=[
                # per-image patch tile (leading batch dim squeezed)
                pl.BlockSpec((None, KC, P), lambda b: (b, 0, 0)),
                # grid-invariant weights / biases
                pl.BlockSpec((F_PAD, KC), lambda b: (0, 0)),
                pl.BlockSpec((F_PAD, 1), lambda b: (0, 0)),
                pl.BlockSpec((F_PAD, P, N_PAD), lambda b: (0, 0, 0)),
                pl.BlockSpec((1, N_PAD), lambda b: (0, 0)),
            ],
            out_specs=pl.BlockSpec((None, 1, N_PAD), lambda b: (b, 0, 0)),
        ),
        compiler_params=pltpu.CompilerParams(
            dimension_semantics=("parallel",),      # shard batch across TCs on v7x
            vmem_limit_bytes=32 * 1024 * 1024,      # safe on v5e/v6e/v7x
        ),
    )(patches, cw, cb, fw, fb)

    return out.reshape(B, N_PAD)[:, :num_classes]


# ------------------------------ reference ----------------------------------

def _reference_forward(x, conv_w, conv_b, fc_w, fc_b, num_filters):
    # Pure-JAX reference replicating PyTorch semantics.
    B = x.shape[0]
    out = jax.lax.conv_general_dilated(
        x, conv_w, window_strides=(2, 2), padding="VALID",
        dimension_numbers=("NCHW", "OIHW", "NCHW"))
    out = out + conv_b.reshape(1, num_filters, 1, 1)
    out = jnp.maximum(out, 0.0)
    out = out.reshape(B, -1)
    logits = out @ fc_w.T + fc_b
    return jax.nn.log_softmax(logits, axis=1)


# --------------------------------- main -------------------------------------

if __name__ == "__main__":
    num_filters = 4
    num_classes = 10
    B, C, H, W = 2, 3, 32, 32   # CIFAR shape implied by 144 = 12*12

    key = jax.random.PRNGKey(0)
    kx, kcw, kcb, kfw, kfb = jax.random.split(key, 5)

    x = jax.random.normal(kx, (B, C, H, W), dtype=jnp.float32)

    conv_fan_in = C * 10 * 10
    conv_bound = 1.0 / jnp.sqrt(conv_fan_in)
    conv_w = jax.random.uniform(kcw, (num_filters, C, 10, 10),
                                minval=-conv_bound, maxval=conv_bound,
                                dtype=jnp.float32)
    conv_b = jax.random.uniform(kcb, (num_filters,),
                                minval=-conv_bound, maxval=conv_bound,
                                dtype=jnp.float32)

    fc_in = 144 * num_filters
    fc_bound = 1.0 / jnp.sqrt(fc_in)
    fc_w = jax.random.uniform(kfw, (num_classes, fc_in),
                              minval=-fc_bound, maxval=fc_bound,
                              dtype=jnp.float32)
    fc_b = jax.random.uniform(kfb, (num_classes,),
                              minval=-fc_bound, maxval=fc_bound,
                              dtype=jnp.float32)

    out = simple_cnn1layer_forward(x, conv_w, conv_b, fc_w, fc_b,
                                   num_filters=num_filters,
                                   num_classes=num_classes)
    out = jax.block_until_ready(out)

    ref = _reference_forward(x, conv_w, conv_b, fc_w, fc_b, num_filters)
    assert out.shape == (B, num_classes)
    assert jnp.allclose(out, ref, atol=1e-4, rtol=1e-4), "mismatch vs reference"

    print("KERNEL_OK")
</pallas_src>

<mosaic_0001>
module attributes {stable_mosaic.version = 11 : i64} {
  func.func @_fused_cnn_kernel(%arg0: i32, %arg1: memref<1x300x144xf32, #tpu.memory_space<vmem>>, %arg2: memref<8x300xf32, #tpu.memory_space<vmem>>, %arg3: memref<8x1xf32, #tpu.memory_space<vmem>>, %arg4: memref<8x144x128xf32, #tpu.memory_space<vmem>>, %arg5: memref<1x128xf32, #tpu.memory_space<vmem>>, %arg6: memref<1x1x128xf32, #tpu.memory_space<vmem>>) attributes {dimension_semantics = [#tpu.dimension_semantics<parallel>], iteration_bounds = array<i64: 2>, scalar_prefetch = 0 : i64, scratch_operands = 0 : i64, tpu.core_type = #tpu.core_type<tc>, window_params = [{transform_indices = @transform_0, window_bounds = array<i64: 1, 300, 144>}, {pipeline_mode = #tpu.pipeline_mode<synchronous>, transform_indices = @transform_1, window_bounds = array<i64: 8, 300>}, {pipeline_mode = #tpu.pipeline_mode<synchronous>, transform_indices = @transform_2, window_bounds = array<i64: 8, 1>}, {pipeline_mode = #tpu.pipeline_mode<synchronous>, transform_indices = @transform_3, window_bounds = array<i64: 8, 144, 128>}, {pipeline_mode = #tpu.pipeline_mode<synchronous>, transform_indices = @transform_4, window_bounds = array<i64: 1, 128>}, {transform_indices = @transform_5, window_bounds = array<i64: 1, 1, 128>}]} {
    %c0 = arith.constant 0 : index
    %c0_0 = arith.constant 0 : index
    %0 = vector.load %arg2[%c0, %c0_0] : memref<8x300xf32, #tpu.memory_space<vmem>>, vector<8x300xf32>
    %c0_1 = arith.constant 0 : index
    %c0_2 = arith.constant 0 : index
    %c0_3 = arith.constant 0 : index
    %1 = vector.load %arg1[%c0_1, %c0_2, %c0_3] : memref<1x300x144xf32, #tpu.memory_space<vmem>>, vector<1x300x144xf32>
    %2 = vector.shape_cast %1 : vector<1x300x144xf32> to vector<300x144xf32>
    %cst = arith.constant dense<0.000000e+00> : vector<8x144xf32>
    %3 = tpu.matmul %0, %2, %cst {dimension_numbers = #tpu.dot_dimension_numbers<[1], [0], [0], [1], [0, 0, 1, 1], [], []>} : vector<8x300xf32>, vector<300x144xf32>, vector<8x144xf32> -> vector<8x144xf32>
    %c0_4 = arith.constant 0 : index
    %c0_5 = arith.constant 0 : index
    %4 = vector.load %arg3[%c0_4, %c0_5] : memref<8x1xf32, #tpu.memory_space<vmem>>, vector<8x1xf32>
    %5 = vector.broadcast %4 : vector<8x1xf32> to vector<8x144xf32>
    %6 = arith.addf %3, %5 : vector<8x144xf32>
    %cst_6 = arith.constant 0.000000e+00 : f32
    %7 = vector.broadcast %cst_6 : f32 to vector<8x144xf32>
    %8 = arith.maximumf %6, %7 : vector<8x144xf32>
    %c0_7 = arith.constant 0 : index
    %c0_8 = arith.constant 0 : index
    %9 = vector.load %arg5[%c0_7, %c0_8] : memref<1x128xf32, #tpu.memory_space<vmem>>, vector<1x128xf32>
    %10 = vector.extract_strided_slice %8 {offsets = [0, 0], sizes = [1, 144], strides = [1, 1]} : vector<8x144xf32> to vector<1x144xf32>
    %c0_9 = arith.constant 0 : index
    %c0_10 = arith.constant 0 : index
    %c0_11 = arith.constant 0 : index
    %11 = vector.load %arg4[%c0_9, %c0_10, %c0_11] : memref<8x144x128xf32, #tpu.memory_space<vmem>>, vector<1x144x128xf32>
    %12 = vector.shape_cast %11 : vector<1x144x128xf32> to vector<144x128xf32>
    %cst_12 = arith.constant dense<0.000000e+00> : vector<1x128xf32>
    %13 = tpu.matmul %10, %12, %cst_12 {dimension_numbers = #tpu.dot_dimension_numbers<[1], [0], [0], [1], [0, 0, 1, 1], [], []>} : vector<1x144xf32>, vector<144x128xf32>, vector<1x128xf32> -> vector<1x128xf32>
    %14 = arith.addf %9, %13 : vector<1x128xf32>
    %15 = vector.extract_strided_slice %8 {offsets = [1, 0], sizes = [1, 144], strides = [1, 1]} : vector<8x144xf32> to vector<1x144xf32>
    %c1 = arith.constant 1 : index
    %c0_13 = arith.constant 0 : index
    %c0_14 = arith.constant 0 : index
    %16 = vector.load %arg4[%c1, %c0_13, %c0_14] : memref<8x144x128xf32, #tpu.memory_space<vmem>>, vector<1x144x128xf32>
    %17 = vector.shape_cast %16 : vector<1x144x128xf32> to vector<144x128xf32>
    %cst_15 = arith.constant dense<0.000000e+00> : vector<1x128xf32>
    %18 = tpu.matmul %15, %17, %cst_15 {dimension_numbers = #tpu.dot_dimension_numbers<[1], [0], [0], [1], [0, 0, 1, 1], [], []>} : vector<1x144xf32>, vector<144x128xf32>, vector<1x128xf32> -> vector<1x128xf32>
    %19 = arith.addf %14, %18 : vector<1x128xf32>
    %20 = vector.extract_strided_slice %8 {offsets = [2, 0], sizes = [1, 144], strides = [1, 1]} : vector<8x144xf32> to vector<1x144xf32>
    %c2 = arith.constant 2 : index
    %c0_16 = arith.constant 0 : index
    %c0_17 = arith.constant 0 : index
    %21 = vector.load %arg4[%c2, %c0_16, %c0_17] : memref<8x144x128xf32, #tpu.memory_space<vmem>>, vector<1x144x128xf32>
    %22 = vector.shape_cast %21 : vector<1x144x128xf32> to vector<144x128xf32>
    %cst_18 = arith.constant dense<0.000000e+00> : vector<1x128xf32>
    %23 = tpu.matmul %20, %22, %cst_18 {dimension_numbers = #tpu.dot_dimension_numbers<[1], [0], [0], [1], [0, 0, 1, 1], [], []>} : vector<1x144xf32>, vector<144x128xf32>, vector<1x128xf32> -> vector<1x128xf32>
    %24 = arith.addf %19, %23 : vector<1x128xf32>
    %25 = vector.extract_strided_slice %8 {offsets = [3, 0], sizes = [1, 144], strides = [1, 1]} : vector<8x144xf32> to vector<1x144xf32>
    %c3 = arith.constant 3 : index
    %c0_19 = arith.constant 0 : index
    %c0_20 = arith.constant 0 : index
    %26 = vector.load %arg4[%c3, %c0_19, %c0_20] : memref<8x144x128xf32, #tpu.memory_space<vmem>>, vector<1x144x128xf32>
    %27 = vector.shape_cast %26 : vector<1x144x128xf32> to vector<144x128xf32>
    %cst_21 = arith.constant dense<0.000000e+00> : vector<1x128xf32>
    %28 = tpu.matmul %25, %27, %cst_21 {dimension_numbers = #tpu.dot_dimension_numbers<[1], [0], [0], [1], [0, 0, 1, 1], [], []>} : vector<1x144xf32>, vector<144x128xf32>, vector<1x128xf32> -> vector<1x128xf32>
    %29 = arith.addf %24, %28 : vector<1x128xf32>
    %30 = vector.extract_strided_slice %8 {offsets = [4, 0], sizes = [1, 144], strides = [1, 1]} : vector<8x144xf32> to vector<1x144xf32>
    %c4 = arith.constant 4 : index
    %c0_22 = arith.constant 0 : index
    %c0_23 = arith.constant 0 : index
    %31 = vector.load %arg4[%c4, %c0_22, %c0_23] : memref<8x144x128xf32, #tpu.memory_space<vmem>>, vector<1x144x128xf32>
    %32 = vector.shape_cast %31 : vector<1x144x128xf32> to vector<144x128xf32>
    %cst_24 = arith.constant dense<0.000000e+00> : vector<1x128xf32>
    %33 = tpu.matmul %30, %32, %cst_24 {dimension_numbers = #tpu.dot_dimension_numbers<[1], [0], [0], [1], [0, 0, 1, 1], [], []>} : vector<1x144xf32>, vector<144x128xf32>, vector<1x128xf32> -> vector<1x128xf32>
    %34 = arith.addf %29, %33 : vector<1x128xf32>
    %35 = vector.extract_strided_slice %8 {offsets = [5, 0], sizes = [1, 144], strides = [1, 1]} : vector<8x144xf32> to vector<1x144xf32>
    %c5 = arith.constant 5 : index
    %c0_25 = arith.constant 0 : index
    %c0_26 = arith.constant 0 : index
    %36 = vector.load %arg4[%c5, %c0_25, %c0_26] : memref<8x144x128xf32, #tpu.memory_space<vmem>>, vector<1x144x128xf32>
    %37 = vector.shape_cast %36 : vector<1x144x128xf32> to vector<144x128xf32>
    %cst_27 = arith.constant dense<0.000000e+00> : vector<1x128xf32>
    %38 = tpu.matmul %35, %37, %cst_27 {dimension_numbers = #tpu.dot_dimension_numbers<[1], [0], [0], [1], [0, 0, 1, 1], [], []>} : vector<1x144xf32>, vector<144x128xf32>, vector<1x128xf32> -> vector<1x128xf32>
    %39 = arith.addf %34, %38 : vector<1x128xf32>
    %40 = vector.extract_strided_slice %8 {offsets = [6, 0], sizes = [1, 144], strides = [1, 1]} : vector<8x144xf32> to vector<1x144xf32>
    %c6 = arith.constant 6 : index
    %c0_28 = arith.constant 0 : index
    %c0_29 = arith.constant 0 : index
    %41 = vector.load %arg4[%c6, %c0_28, %c0_29] : memref<8x144x128xf32, #tpu.memory_space<vmem>>, vector<1x144x128xf32>
    %42 = vector.shape_cast %41 : vector<1x144x128xf32> to vector<144x128xf32>
    %cst_30 = arith.constant dense<0.000000e+00> : vector<1x128xf32>
    %43 = tpu.matmul %40, %42, %cst_30 {dimension_numbers = #tpu.dot_dimension_numbers<[1], [0], [0], [1], [0, 0, 1, 1], [], []>} : vector<1x144xf32>, vector<144x128xf32>, vector<1x128xf32> -> vector<1x128xf32>
    %44 = arith.addf %39, %43 : vector<1x128xf32>
    %45 = vector.extract_strided_slice %8 {offsets = [7, 0], sizes = [1, 144], strides = [1, 1]} : vector<8x144xf32> to vector<1x144xf32>
    %c7 = arith.constant 7 : index
    %c0_31 = arith.constant 0 : index
    %c0_32 = arith.constant 0 : index
    %46 = vector.load %arg4[%c7, %c0_31, %c0_32] : memref<8x144x128xf32, #tpu.memory_space<vmem>>, vector<1x144x128xf32>
    %47 = vector.shape_cast %46 : vector<1x144x128xf32> to vector<144x128xf32>
    %cst_33 = arith.constant dense<0.000000e+00> : vector<1x128xf32>
    %48 = tpu.matmul %45, %47, %cst_33 {dimension_numbers = #tpu.dot_dimension_numbers<[1], [0], [0], [1], [0, 0, 1, 1], [], []>} : vector<1x144xf32>, vector<144x128xf32>, vector<1x128xf32> -> vector<1x128xf32>
    %49 = arith.addf %44, %48 : vector<1x128xf32>
    %cst_34 = arith.constant dense<0xFF800000> : vector<1xf32>
    %50 = vector.multi_reduction <maximumf>, %49, %cst_34 [1] : vector<1x128xf32> to vector<1xf32>
    %51 = vector.shape_cast %50 : vector<1xf32> to vector<1x1xf32>
    %52 = vector.broadcast %51 : vector<1x1xf32> to vector<1x128xf32>
    %53 = arith.subf %49, %52 : vector<1x128xf32>
    %54 = math.exp %53 : vector<1x128xf32>
    %cst_35 = arith.constant dense<0.000000e+00> : vector<1xf32>
    %55 = vector.multi_reduction <add>, %54, %cst_35 [1] : vector<1x128xf32> to vector<1xf32>
    %56 = vector.shape_cast %55 : vector<1xf32> to vector<1x1xf32>
    %57 = math.log %56 : vector<1x1xf32>
    %58 = vector.broadcast %57 : vector<1x1xf32> to vector<1x128xf32>
    %59 = arith.subf %53, %58 : vector<1x128xf32>
    %c0_36 = arith.constant 0 : index
    %c0_37 = arith.constant 0 : index
    %c0_38 = arith.constant 0 : index
    %60 = vector.load %arg6[%c0_36, %c0_37, %c0_38] : memref<1x1x128xf32, #tpu.memory_space<vmem>>, vector<1x1x128xf32>
    %61 = vector.shape_cast %60 : vector<1x1x128xf32> to vector<1x128xf32>
    %62 = vector.shape_cast %59 : vector<1x128xf32> to vector<1x1x128xf32>
    tpu.vector_store %arg6[%c0_36, %c0_37, %c0_38], %62 {strides = array<i32>} : memref<1x1x128xf32, #tpu.memory_space<vmem>>, vector<1x1x128xf32>,
    return
  }
  func.func @transform_0(%arg0: i32) -> (i32, i32, i32) {
    %c0_i32 = arith.constant 0 : i32
    %c0_i32_0 = arith.constant 0 : i32
    %c0_i32_1 = arith.constant 0 : i32
    return %arg0, %c0_i32, %c0_i32_0 : i32, i32, i32
  }
  func.func @transform_1(%arg0: i32) -> (i32, i32) {
    %c0_i32 = arith.constant 0 : i32
    %c0_i32_0 = arith.constant 0 : i32
    %c0_i32_1 = arith.constant 0 : i32
    return %c0_i32, %c0_i32_0 : i32, i32
  }
  func.func @transform_2(%arg0: i32) -> (i32, i32) {
    %c0_i32 = arith.constant 0 : i32
    %c0_i32_0 = arith.constant 0 : i32
    %c0_i32_1 = arith.constant 0 : i32
    return %c0_i32, %c0_i32_0 : i32, i32
  }
  func.func @transform_3(%arg0: i32) -> (i32, i32, i32) {
    %c0_i32 = arith.constant 0 : i32
    %c0_i32_0 = arith.constant 0 : i32
    %c0_i32_1 = arith.constant 0 : i32
    %c0_i32_2 = arith.constant 0 : i32
    return %c0_i32, %c0_i32_0, %c0_i32_1 : i32, i32, i32
  }
  func.func @transform_4(%arg0: i32) -> (i32, i32) {
    %c0_i32 = arith.constant 0 : i32
    %c0_i32_0 = arith.constant 0 : i32
    %c0_i32_1 = arith.constant 0 : i32
    return %c0_i32, %c0_i32_0 : i32, i32
  }
  func.func @transform_5(%arg0: i32) -> (i32, i32, i32) {
    %c0_i32 = arith.constant 0 : i32
    %c0_i32_0 = arith.constant 0 : i32
    %c0_i32_1 = arith.constant 0 : i32
    return %arg0, %c0_i32, %c0_i32_0 : i32, i32, i32
  }
}

</mosaic_0001>

<llo_original>
// kernel: simple_cnn1layer_forward.1
$region0: #{simple_cnn1layer_forward.1}
  #allocation0 [shape = 'u32[]', space=smem, size = 0x4, offset = 0x4, fixed_abs, tag = 'smem constant byte address 0x4 - core index']
  #allocation1 [shape = 'u32[144,128]{1,0:T(1,128)}', space=vmem, size = 0x12000, scoped, tag = 'internal scratch']
  %s0 = inlined_call_operand.vmem [shape: f32[2,300,144], index: 0, kind: input, shape index: {}]
  %s1 = inlined_call_operand.vmem [shape: f32[8,300], index: 1, kind: input, shape index: {}]
  %s2 = inlined_call_operand.vmem [shape: f32[8,1], index: 2, kind: input, shape index: {}]
  %s3 = inlined_call_operand.vmem [shape: f32[8,144,128], index: 3, kind: input, shape index: {}]
  %s4 = inlined_call_operand.vmem [shape: f32[1,128], index: 4, kind: input, shape index: {}]
  %s5 = inlined_call_operand.hbm [shape: f32[2,1,128], index: 5, kind: output, shape index: {}]
  %s6 = sld [smem:[#allocation0]]
  $region53: #{simple_cnn1layer_forward.1} parent=0
    _
  %s8 = ssub.s32 1, %s6
  %s9 = scalar_select 0, %s8, %s6
  $region1: #{simple_cnn1layer_forward.1} parent=0
    #allocation2 [shape = 'u8[1024]{0}', space=vmem, size = 0x400, scoped, tag = 'output window, operand 0']
    #allocation3 [shape = 's32[2]{0}', space=sflag, size = 0x8, scoped, tag = 'scoped memory for simple_cnn1layer_forward.1']
    %10 = vsyncpa [#allocation3], 0
    %s11 = scalar_lea.sflag [#allocation3], 1
    %12 = vsyncpa %s11, 0
    loop: start=0, step=1, limit=4
    $region2: #{simple_cnn1layer_forward.1} parent=1 // loop_pre_header
      _
    $region3: #{simple_cnn1layer_forward.1} parent=1 // loop_header
      %s14 = sphi 0, %s18
      %p15 = scmp.ge.s32.totalorder %s14, 4
      %s24 = sphi 0, %s26
      %s27 = sphi 0, %s24
      %s28 = sphi 0, %s27
      %s44 = sphi 0, %s28
      %s48 = sphi 0, %s48
      %s50 = sphi 0, %s48
      %s51 = sphi 0, %s50
      %s65 = sphi 0, %s51
      %s69 = sphi 0, %s69
      %s71 = sphi 0, %s69
      %s72 = sphi 0, %s71
      %s86 = sphi 0, %s72
      %s90 = sphi 0, %s90
      %s92 = sphi 0, %s90
      %s93 = sphi 0, %s92
      %s107 = sphi 0, %s93
      %s111 = sphi 0, %s111
      %s113 = sphi 0, %s111
      %s114 = sphi 0, %s113
      %s128 = sphi 0, %s114
      %s134 = sphi 0, %s136
      %s137 = sphi 0, %s134
      %s138 = sphi 0, %s137
      %s154 = sphi 0, %s138
    $region4: #{simple_cnn1layer_forward.1} parent=1 // loop_header_branch
      %17 = sbr.rel (%p15) target = $region8
    $region5: #{simple_cnn1layer_forward.1} parent=1 // loop_body
      %s19 = ssub.s32 %s14, 1
      %s20 = ssub.s32 %s14, 2
      %s21 = sadd.s32 %s14, 1
      %s22 = ssub.s32 %s14, %s21
      %p23 = scmp.eq.s32.totalorder %s22, 0
      %s25 = sadd.s32 %s24, 1
      %s26 = scalar_select %p23, %s24, %s25
      %p29 = pneg %p23
      %p30 = scmp.eq.s32.totalorder %s14, 1
      %p31 = por %p29, %p30
      %p32 = scmp.ne.s32.totalorder %s24, %s27
      %p33 = scmp.eq.s32.totalorder %s14, 0
      %p34 = por %p32, %p33
      %p35 = scmp.ne.s32.totalorder %s24, %s27
      %p36 = scmp.eq.s32.totalorder %s19, 1
      %p37 = por %p35, %p36
      %p38 = scmp.ne.s32.totalorder %s27, %s28
      %p39 = scmp.eq.s32.totalorder %s19, 0
      %p40 = por %p38, %p39
      %p41 = scmp.ne.s32.totalorder %s27, %s28
      %p42 = scmp.eq.s32.totalorder %s20, 1
      %p43 = por %p41, %p42
      %p45 = scmp.ne.s32.totalorder %s28, %s44
      %p46 = scmp.eq.s32.totalorder %s20, 0
      %p47 = por %p45, %p46
      %s49 = sadd.s32 %s48, 1
      %p52 = scmp.eq.s32.totalorder %s14, 1
      %p53 = scmp.ne.s32.totalorder %s48, %s50
      %p54 = scmp.eq.s32.totalorder %s14, 0
      %p55 = por %p53, %p54
      %p56 = scmp.ne.s32.totalorder %s48, %s50
      %p57 = scmp.eq.s32.totalorder %s19, 1
      %p58 = por %p56, %p57
      %p59 = scmp.ne.s32.totalorder %s50, %s51
      %p60 = scmp.eq.s32.totalorder %s19, 0
      %p61 = por %p59, %p60
      %p62 = scmp.ne.s32.totalorder %s50, %s51
      %p63 = scmp.eq.s32.totalorder %s20, 1
      %p64 = por %p62, %p63
      %p66 = scmp.ne.s32.totalorder %s51, %s65
      %p67 = scmp.eq.s32.totalorder %s20, 0
      %p68 = por %p66, %p67
      %s70 = sadd.s32 %s69, 1
      %p73 = scmp.eq.s32.totalorder %s14, 1
      %p74 = scmp.ne.s32.totalorder %s69, %s71
      %p75 = scmp.eq.s32.totalorder %s14, 0
      %p76 = por %p74, %p75
      %p77 = scmp.ne.s32.totalorder %s69, %s71
      %p78 = scmp.eq.s32.totalorder %s19, 1
      %p79 = por %p77, %p78
      %p80 = scmp.ne.s32.totalorder %s71, %s72
      %p81 = scmp.eq.s32.totalorder %s19, 0
      %p82 = por %p80, %p81
      %p83 = scmp.ne.s32.totalorder %s71, %s72
      %p84 = scmp.eq.s32.totalorder %s20, 1
      %p85 = por %p83, %p84
      %p87 = scmp.ne.s32.totalorder %s72, %s86
      %p88 = scmp.eq.s32.totalorder %s20, 0
      %p89 = por %p87, %p88
      %s91 = sadd.s32 %s90, 1
      %p94 = scmp.eq.s32.totalorder %s14, 1
      %p95 = scmp.ne.s32.totalorder %s90, %s92
      %p96 = scmp.eq.s32.totalorder %s14, 0
      %p97 = por %p95, %p96
      %p98 = scmp.ne.s32.totalorder %s90, %s92
      %p99 = scmp.eq.s32.totalorder %s19, 1
      %p100 = por %p98, %p99
      %p101 = scmp.ne.s32.totalorder %s92, %s93
      %p102 = scmp.eq.s32.totalorder %s19, 0
      %p103 = por %p101, %p102
      %p104 = scmp.ne.s32.totalorder %s92, %s93
      %p105 = scmp.eq.s32.totalorder %s20, 1
      %p106 = por %p104, %p105
      %p108 = scmp.ne.s32.totalorder %s93, %s107
      %p109 = scmp.eq.s32.totalorder %s20, 0
      %p110 = por %p108, %p109
      %s112 = sadd.s32 %s111, 1
      %p115 = scmp.eq.s32.totalorder %s14, 1
      %p116 = scmp.ne.s32.totalorder %s111, %s113
      %p117 = scmp.eq.s32.totalorder %s14, 0
      %p118 = por %p116, %p117
      %p119 = scmp.ne.s32.totalorder %s111, %s113
      %p120 = scmp.eq.s32.totalorder %s19, 1
      %p121 = por %p119, %p120
      %p122 = scmp.ne.s32.totalorder %s113, %s114
      %p123 = scmp.eq.s32.totalorder %s19, 0
      %p124 = por %p122, %p123
      %p125 = scmp.ne.s32.totalorder %s113, %s114
      %p126 = scmp.eq.s32.totalorder %s20, 1
      %p127 = por %p125, %p126
      %p129 = scmp.ne.s32.totalorder %s114, %s128
      %p130 = scmp.eq.s32.totalorder %s20, 0
      %p131 = por %p129, %p130
      %s132 = ssub.s32 %s14, %s21
      %p133 = scmp.eq.s32.totalorder %s132, 0
      %s135 = sadd.s32 %s134, 1
      %s136 = scalar_select %p133, %s134, %s135
      %p139 = pneg %p133
      %p140 = scmp.eq.s32.totalorder %s14, 1
      %p141 = por %p139, %p140
      %p142 = scmp.ne.s32.totalorder %s134, %s137
      %p143 = scmp.eq.s32.totalorder %s14, 0
      %p144 = por %p142, %p143
      %p145 = scmp.ne.s32.totalorder %s134, %s137
      %p146 = scmp.eq.s32.totalorder %s19, 1
      %p147 = por %p145, %p146
      %p148 = scmp.ne.s32.totalorder %s137, %s138
      %p149 = scmp.eq.s32.totalorder %s19, 0
      %p150 = por %p148, %p149
      %p151 = scmp.ne.s32.totalorder %s137, %s138
      %p152 = scmp.eq.s32.totalorder %s20, 1
      %p153 = por %p151, %p152
      %p155 = scmp.ne.s32.totalorder %s138, %s154
      %p156 = scmp.eq.s32.totalorder %s20, 0
      %p157 = por %p155, %p156
      %p158 = scmp.le.s32.totalorder 1, %s14
      %p159 = scmp.lt.s32.totalorder %s14, 3
      %p160 = pnand %p158, %p159
      %p161 = pneg %p160
      // Predicated region
      $region9: #{simple_cnn1layer_forward.1} parent=5 // pred_check
        _
      $region10: #{simple_cnn1layer_forward.1} parent=5 // pred_check_branch
        %163 = sbr.rel (%p160) target = $region12
      $region11: #{simple_cnn1layer_forward.1} parent=5 // pred_region
        %s164 = ssub.s32 %s14, 1
        // Predicated region
        $region13: #{simple_cnn1layer_forward.1} parent=11 // pred_check
          %p165 = pneg %p61
        $region14: #{simple_cnn1layer_forward.1} parent=11 // pred_check_branch
          %167 = sbr.rel (%p165) target = $region16
        $region15: #{simple_cnn1layer_forward.1} parent=11 // pred_region
          _
        $region16: #{simple_cnn1layer_forward.1} parent=11 // pred_fallthru
          _
        // Predicated region
        $region17: #{simple_cnn1layer_forward.1} parent=11 // pred_check
          %p168 = pneg %p82
        $region18: #{simple_cnn1layer_forward.1} parent=11 // pred_check_branch
          %170 = sbr.rel (%p168) target = $region20
        $region19: #{simple_cnn1layer_forward.1} parent=11 // pred_region
          _
        $region20: #{simple_cnn1layer_forward.1} parent=11 // pred_fallthru
          _
        // Predicated region
        $region21: #{simple_cnn1layer_forward.1} parent=11 // pred_check
          %p171 = pneg %p103
        $region22: #{simple_cnn1layer_forward.1} parent=11 // pred_check_branch
          %173 = sbr.rel (%p171) target = $region24
        $region23: #{simple_cnn1layer_forward.1} parent=11 // pred_region
          _
        $region24: #{simple_cnn1layer_forward.1} parent=11 // pred_fallthru
          _
        // Predicated region
        $region25: #{simple_cnn1layer_forward.1} parent=11 // pred_check
          %p174 = pneg %p124
        $region26: #{simple_cnn1layer_forward.1} parent=11 // pred_check_branch
          %176 = sbr.rel (%p174) target = $region28
        $region27: #{simple_cnn1layer_forward.1} parent=11 // pred_region
          _
        $region28: #{simple_cnn1layer_forward.1} parent=11 // pred_fallthru
          _
      $region12: #{simple_cnn1layer_forward.1} parent=5 // pred_fallthru
        _
      %p177 = scmp.lt.s32.totalorder %s14, 2
      // Predicated region
      $region29: #{simple_cnn1layer_forward.1} parent=5 // pred_check
        %p178 = pneg %p177
      $region30: #{simple_cnn1layer_forward.1} parent=5 // pred_check_branch
        %180 = sbr.rel (%p178) target = $region32
      $region31: #{simple_cnn1layer_forward.1} parent=5 // pred_region
        // Predicated region
        $region33: #{simple_cnn1layer_forward.1} parent=31 // pred_check
          %p181 = pneg %p34
        $region34: #{simple_cnn1layer_forward.1} parent=31 // pred_check_branch
          %183 = sbr.rel (%p181) target = $region36
        $region35: #{simple_cnn1layer_forward.1} parent=31 // pred_region
          %p184 = scmp.lt.s32.totalorder %s14, 1
          %s185 = scalar_select %p184, %s14, 1
          %s186 = smul.addr %s185, 76
          %s187 = smul.addr %s186, 8
          %s188 = scalar_lea.vmem %s0, %s187
        $region36: #{simple_cnn1layer_forward.1} parent=31 // pred_fallthru
          _
      $region32: #{simple_cnn1layer_forward.1} parent=5 // pred_fallthru
        _
      %p189 = scmp.le.s32.totalorder 1, %s14
      %p190 = scmp.lt.s32.totalorder %s14, 3
      %p191 = pnand %p189, %p190
      %p192 = pneg %p191
      // Predicated region
      $region37: #{simple_cnn1layer_forward.1} parent=5 // pred_check
        _
      $region38: #{simple_cnn1layer_forward.1} parent=5 // pred_check_branch
        %194 = sbr.rel (%p191) target = $region40
      $region39: #{simple_cnn1layer_forward.1} parent=5 // pred_region
        %s195 = ssub.s32 %s14, 1
        %p196 = scmp.lt.s32.totalorder %s19, 1
        %s197 = scalar_select %p196, %s19, 1
        %s198 = smul.addr %s197, 76
        %s199 = smul.addr %s198, 8
        %s200 = scalar_lea.vmem %s0, %s199
        %p201 = pneg %p40
        %p202 = pneg %p37
        %p203 = pneg %p61
        %p204 = pneg %p58
        %p205 = pneg %p82
        %p206 = pneg %p79
        %p207 = pneg %p103
        %p208 = pneg %p100
        %p209 = pneg %p124
        %p210 = pneg %p121
        %p211 = pneg %p150
        %p212 = pneg %p147
        %s213 = sand.u32 %s137, 1
        %s214 = scalar_lea.sflag [#allocation3], %s213
        %s215 = sand.u32 %s137, 1
        %s216 = scalar_lea.vmem [#allocation2], %s215
        %p217 = scmp.lt.s32.totalorder %s19, 1
        %s218 = scalar_select %p217, %s19, 1
        %s219 = smul.addr %s218, 76
        %s220 = smul.addr %s219, 8
        %s221 = scalar_lea.vmem %s0, %s220
        %v222 = vld [vmem:[%s1] sm:$0xff]
        %v223 = vld [vmem:[%s1 + $0x8] sm:$0xff]
        %v224 = vld [vmem:[%s1 + $0x10] sm:$0xff]
        %v225 = vld [vmem:[%s221] sm:$0xff]
        %v226 = vld [vmem:[%s221 + $0x8] sm:$0xff]
        %v227 = vld [vmem:[%s221 + $0x10] sm:$0xff]
        %v228 = vld [vmem:[%s221 + $0x18] sm:$0xff]
        %v229 = vld [vmem:[%s221 + $0x20] sm:$0xff]
        %v230 = vld [vmem:[%s221 + $0x28] sm:$0xff]
        %v231 = vld [vmem:[%s221 + $0x30] sm:$0xff]
        %v232 = vld [vmem:[%s221 + $0x38] sm:$0xff]
        %v233 = vld [vmem:[%s221 + $0x40] sm:$0xff]
        %v234 = vld [vmem:[%s221 + $0x48] sm:$0xff]
        %v235 = vld [vmem:[%s221 + $0x50] sm:$0xff]
        %v236 = vld [vmem:[%s221 + $0x58] sm:$0xff]
        %v237 = vld [vmem:[%s221 + $0x60] sm:$0xff]
        %v238 = vld [vmem:[%s221 + $0x68] sm:$0xff]
        %v239 = vld [vmem:[%s221 + $0x70] sm:$0xff]
        %v240 = vld [vmem:[%s221 + $0x78] sm:$0xff]
        %v241 = vld [vmem:[%s221 + $0x80] sm:$0xff]
        %v242 = vld [vmem:[%s221 + $0x88] sm:$0xff]
        %v243 = vld [vmem:[%s221 + $0x90] sm:$0xff]
        %v244 = vld [vmem:[%s221 + $0x98] sm:$0xff]
        %v245 = vld [vmem:[%s221 + $0xa0] sm:$0xff]
        %v246 = vld [vmem:[%s221 + $0xa8] sm:$0xff]
        %v247 = vld [vmem:[%s221 + $0xb0] sm:$0xff]
        %v248 = vld [vmem:[%s221 + $0xb8] sm:$0xff]
        %v249 = vld [vmem:[%s221 + $0xc0] sm:$0xff]
        %v250 = vld [vmem:[%s221 + $0xc8] sm:$0xff]
        %v251 = vld [vmem:[%s221 + $0xd0] sm:$0xff]
        %v252 = vld [vmem:[%s221 + $0xd8] sm:$0xff]
        %v253 = vld [vmem:[%s221 + $0xe0] sm:$0xff]
        %v254 = vld [vmem:[%s221 + $0xe8] sm:$0xff]
        %v255 = vld [vmem:[%s221 + $0xf0] sm:$0xff]
        %v256 = vld [vmem:[%s221 + $0xf8] sm:$0xff]
        %v257 = vld [vmem:[%s221 + $0x100] sm:$0xff]
        %v258 = vld [vmem:[%s221 + $0x108] sm:$0xff]
        %v259 = vld [vmem:[%s221 + $0x110] sm:$0xff]
        %v260 = vld [vmem:[%s221 + $0x118] sm:$0xff]
        %v261 = vld [vmem:[%s221 + $0x120] sm:$0xff]
        %v262 = vld [vmem:[%s221 + $0x128] sm:$0xff]
        %v263 = vld [vmem:[%s221 + $0x130] sm:$0xff]
        %v264 = vld [vmem:[%s221 + $0x138] sm:$0xff]
        %v265 = vld [vmem:[%s221 + $0x140] sm:$0xff]
        %v266 = vld [vmem:[%s221 + $0x148] sm:$0xff]
        %v267 = vld [vmem:[%s221 + $0x150] sm:$0xff]
        %v268 = vld [vmem:[%s221 + $0x158] sm:$0xff]
        %v269 = vld [vmem:[%s221 + $0x160] sm:$0xff]
        %v270 = vld [vmem:[%s221 + $0x168] sm:$0xff]
        %v271 = vld [vmem:[%s221 + $0x170] sm:$0xff]
        %v272 = vld [vmem:[%s221 + $0x178] sm:$0xff]
        %v273 = vld [vmem:[%s221 + $0x180] sm:$0xff]
        %v274 = vld [vmem:[%s221 + $0x188] sm:$0xff]
        %v275 = vld [vmem:[%s221 + $0x190] sm:$0xff]
        %v276 = vld [vmem:[%s221 + $0x198] sm:$0xff]
        %v277 = vld [vmem:[%s221 + $0x1a0] sm:$0xff]
        %v278 = vld [vmem:[%s221 + $0x1a8] sm:$0xff]
        %v279 = vld [vmem:[%s221 + $0x1b0] sm:$0xff]
        %v280 = vld [vmem:[%s221 + $0x1b8] sm:$0xff]
        %v281 = vld [vmem:[%s221 + $0x1c0] sm:$0xff]
        %v282 = vld [vmem:[%s221 + $0x1c8] sm:$0xff]
        %v283 = vld [vmem:[%s221 + $0x1d0] sm:$0xff]
        %v284 = vld [vmem:[%s221 + $0x1d8] sm:$0xff]
        %v285 = vld [vmem:[%s221 + $0x1e0] sm:$0xff]
        %v286 = vld [vmem:[%s221 + $0x1e8] sm:$0xff]
        %v287 = vld [vmem:[%s221 + $0x1f0] sm:$0xff]
        %v288 = vld [vmem:[%s221 + $0x1f8] sm:$0xff]
        %v289 = vld [vmem:[%s221 + $0x200] sm:$0xff]
        %v290 = vld [vmem:[%s221 + $0x208] sm:$0xff]
        %v291 = vld [vmem:[%s221 + $0x210] sm:$0xff]
        %v292 = vld [vmem:[%s221 + $0x218] sm:$0xff]
        %v293 = vld [vmem:[%s221 + $0x220] sm:$0xff]
        %v294 = vld [vmem:[%s221 + $0x228] sm:$0xff]
        %v295 = vld [vmem:[%s221 + $0x230] sm:$0xff]
        %v296 = vld [vmem:[%s221 + $0x238] sm:$0xff]
        %v297 = vld [vmem:[%s221 + $0x240] sm:$0xff]
        %v298 = vld [vmem:[%s221 + $0x248] sm:$0xff]
        %v299 = vld [vmem:[%s221 + $0x250] sm:$0xf]
        %v300 = vld [vmem:[%s221 + $0x258] sm:$0xf]
        %v301 = vld [vmem:[%s2] sm:$0xff]
        %303 = vset.pattern.permute.xlu0 0
        %304 = vperm.xlu0 %303, %v301
        %v305 = vpop.permute.xlu0 %304
        %vm307 = vcmask 359424
        %v309 = vsel %vm307, %v224, 0
        %vm311 = vcmask 1043456
        %v313 = vsel %vm311, %v299, 0
        %v316 = vsel %vm311, %v300, 0
        %318 = vmatprep.subr.mxu0 %v226
        %319 = vmatpush1.msra.mxu0 %v225
        %320 = vmatprep.subr.mxu0 %v228
        %321 = vmatpush1.msra.mxu0 %v227
        %322 = vmatprep.subr.mxu0 %v230
        %323 = vmatpush1.msra.mxu0 %v229
        %324 = vmatprep.subr.mxu0 %v232
        %325 = vmatpush1.msra.mxu0 %v231
        %326 = vmatprep.subr.mxu0 %v234
        %327 = vmatpush1.msra.mxu0 %v233
        %328 = vmatprep.subr.mxu0 %v236
        %329 = vmatpush1.msra.mxu0 %v235
        %330 = vmatprep.subr.mxu0 %v238
        %331 = vmatpush1.msra.mxu0 %v237
        %332 = vmatprep.subr.mxu0 %v240
        %333 = vmatpush1.msra.mxu0 %v239
        %334 = vmatprep.subr.mxu0 %v242
        %335 = vmatpush1.msra.mxu0 %v241
        %336 = vmatprep.subr.mxu0 %v244
        %337 = vmatpush1.msra.mxu0 %v243
        %338 = vmatprep.subr.mxu0 %v246
        %339 = vmatpush1.msra.mxu0 %v245
        %340 = vmatprep.subr.mxu0 %v248
        %341 = vmatpush1.msra.mxu0 %v247
        %342 = vmatprep.subr.mxu0 %v250
        %343 = vmatpush1.msra.mxu0 %v249
        %344 = vmatprep.subr.mxu0 %v252
        %345 = vmatpush1.msra.mxu0 %v251
        %346 = vmatprep.subr.mxu0 %v254
        %347 = vmatpush1.msra.mxu0 %v253
        %348 = vmatprep.subr.mxu0 %v256
        %349 = vmatpush1.msra.mxu0 %v255
        %350 = vmatprep.subr.mxu0 %v258
        %351 = vmatpush1.msra.mxu0 %v257
        %352 = vmatprep.subr.mxu0 %v260
        %353 = vmatpush1.msra.mxu0 %v259
        %354 = vmatprep.subr.mxu0 %v262
        %355 = vmatpush1.msra.mxu0 %v261
        %356 = vmatprep.subr.mxu0 %v264
        %357 = vmatpush1.msra.mxu0 %v263
        %358 = vmatprep.subr.mxu0 %v266
        %359 = vmatpush1.msra.mxu0 %v265
        %360 = vmatprep.subr.mxu0 %v268
        %361 = vmatpush1.msra.mxu0 %v267
        %362 = vmatprep.subr.mxu0 %v270
        %363 = vmatpush1.msra.mxu0 %v269
        %364 = vmatprep.subr.mxu0 %v272
        %365 = vmatpush1.msra.mxu0 %v271
        %366 = vmatprep.subr.mxu0 %v274
        %367 = vmatpush1.msra.mxu0 %v273
        %368 = vmatprep.subr.mxu0 %v276
        %369 = vmatpush1.msra.mxu0 %v275
        %370 = vmatprep.subr.mxu0 %v278
        %371 = vmatpush1.msra.mxu0 %v277
        %372 = vmatprep.subr.mxu0 %v280
        %373 = vmatpush1.msra.mxu0 %v279
        %374 = vmatprep.subr.mxu0 %v282
        %375 = vmatpush1.msra.mxu0 %v281
        %376 = vmatprep.subr.mxu0 %v284
        %377 = vmatpush1.msra.mxu0 %v283
        %378 = vmatprep.subr.mxu0 %v286
        %379 = vmatpush1.msra.mxu0 %v285
        %380 = vmatprep.subr.mxu0 %v288
        %381 = vmatpush1.msra.mxu0 %v287
        %382 = vmatprep.mubr.f32.mxu0 %v223
        %383 = vmatmul.mubr.f32.gmra.mrb[0].mxu0 %v222
        %v384 = vpop.f32.mrb[0].mxu0
        %v385 = vadd.f32 %v305, %v384
        %v386 = vpop.f32.mrb[0].mxu0
        %v387 = vadd.f32 %v305, %v386
        %388 = vdwg.mxu0
        %389 = vmatprep.subr.mxu0 %v290
        %390 = vmatpush1.msra.mxu0 %v289
        %391 = vmatprep.subr.mxu0 %v292
        %392 = vmatpush1.msra.mxu0 %v291
        %393 = vmatprep.subr.mxu0 %v294
        %394 = vmatpush1.msra.mxu0 %v293
        %395 = vmatprep.subr.mxu0 %v296
        %396 = vmatpush1.msra.mxu0 %v295
        %397 = vmatprep.subr.mxu0 %v298
        %398 = vmatpush1.msra.mxu0 %v297
        %399 = vmatprep.subr.mxu0 %v316
        %400 = vmatpush1.msra.mxu0 %v313
        %401 = vmatprep.subr.mxu0 0.0
        %402 = vmatpush1.msra.mxu0 0.0
        %403 = vmatprep.subr.mxu0 0.0
        %404 = vmatpush1.msra.mxu0 0.0
        %405 = vmatprep.subr.mxu0 0.0
        %406 = vmatpush1.msra.mxu0 0.0
        %407 = vmatprep.subr.mxu0 0.0
        %408 = vmatpush1.msra.mxu0 0.0
        %409 = vmatprep.subr.mxu0 0.0
        %410 = vmatpush1.msra.mxu0 0.0
        %411 = vmatprep.subr.mxu0 0.0
        %412 = vmatpush1.msra.mxu0 0.0
        %413 = vmatprep.subr.mxu0 0.0
        %414 = vmatpush1.msra.mxu0 0.0
        %415 = vmatprep.subr.mxu0 0.0
        %416 = vmatpush1.msra.mxu0 0.0
        %417 = vmatprep.subr.mxu0 0.0
        %418 = vmatpush1.msra.mxu0 0.0
        %419 = vmatprep.subr.mxu0 0.0
        %420 = vmatpush1.msra.mxu0 0.0
        %421 = vmatprep.subr.mxu0 0.0
        %422 = vmatpush1.msra.mxu0 0.0
        %423 = vmatprep.subr.mxu0 0.0
        %424 = vmatpush1.msra.mxu0 0.0
        %425 = vmatprep.subr.mxu0 0.0
        %426 = vmatpush1.msra.mxu0 0.0
        %427 = vmatprep.subr.mxu0 0.0
        %428 = vmatpush1.msra.mxu0 0.0
        %429 = vmatprep.subr.mxu0 0.0
        %430 = vmatpush1.msra.mxu0 0.0
        %431 = vmatprep.subr.mxu0 0.0
        %432 = vmatpush1.msra.mxu0 0.0
        %433 = vmatprep.subr.mxu0 0.0
        %434 = vmatpush1.msra.mxu0 0.0
        %435 = vmatprep.subr.mxu0 0.0
        %436 = vmatpush1.msra.mxu0 0.0
        %437 = vmatprep.subr.mxu0 0.0
        %438 = vmatpush1.msra.mxu0 0.0
        %439 = vmatprep.subr.mxu0 0.0
        %440 = vmatpush1.msra.mxu0 0.0
        %441 = vmatprep.subr.mxu0 0.0
        %442 = vmatpush1.msra.mxu0 0.0
        %443 = vmatprep.subr.mxu0 0.0
        %444 = vmatpush1.msra.mxu0 0.0
        %445 = vmatprep.subr.mxu0 0.0
        %446 = vmatpush1.msra.mxu0 0.0
        %447 = vmatprep.subr.mxu0 0.0
        %448 = vmatpush1.msra.mxu0 0.0
        %449 = vmatprep.subr.mxu0 0.0
        %450 = vmatpush1.msra.mxu0 0.0
        %451 = vmatprep.subr.mxu0 0.0
        %452 = vmatpush1.msra.mxu0 0.0
        %453 = vmatprep.mubr.f32.mxu0 0.0
        %454 = vmatmul.mubr.f32.gmra.mrb[0].mxu0 %v309
        %v455 = vpop.f32.mrb[0].mxu0
        %v456 = vadd.f32 %v385, %v455
        %v457 = vpop.f32.mrb[0].mxu0
        %v458 = vadd.f32 %v387, %v457
        %459 = vdwg.mxu0
        %v460 = vmax.f32 %v456, 0.0
        %v461 = vmax.f32 %v458, 0.0
        %v462 = vld [vmem:[%s4] sm:$0x1]
        %v463 = vld [vmem:[%s3] sm:$0xff]
        %v464 = vld [vmem:[%s3 + $0x8] sm:$0xff]
        %v465 = vld [vmem:[%s3 + $0x10] sm:$0xff]
        %v466 = vld [vmem:[%s3 + $0x18] sm:$0xff]
        %v467 = vld [vmem:[%s3 + $0x20] sm:$0xff]
        %v468 = vld [vmem:[%s3 + $0x28] sm:$0xff]
        %v469 = vld [vmem:[%s3 + $0x30] sm:$0xff]
        %v470 = vld [vmem:[%s3 + $0x38] sm:$0xff]
        %v471 = vld [vmem:[%s3 + $0x40] sm:$0xff]
        %v472 = vld [vmem:[%s3 + $0x48] sm:$0xff]
        %v473 = vld [vmem:[%s3 + $0x50] sm:$0xff]
        %v474 = vld [vmem:[%s3 + $0x58] sm:$0xff]
        %v475 = vld [vmem:[%s3 + $0x60] sm:$0xff]
        %v476 = vld [vmem:[%s3 + $0x68] sm:$0xff]
        %v477 = vld [vmem:[%s3 + $0x70] sm:$0xff]
        %v478 = vld [vmem:[%s3 + $0x78] sm:$0xff]
        %v479 = vld [vmem:[%s3 + $0x80] sm:$0xff]
        %v480 = vld [vmem:[%s3 + $0x88] sm:$0xff]
        %vm481 = vcmask 130048
        %v483 = vsel %vm481, %v461, 0
        %485 = vmatprep.subr.mxu0 0.0
        %486 = vmatpush1.msra.mxu0 %v463
        %487 = vmatprep.subr.mxu0 0.0
        %488 = vmatpush1.msra.mxu0 %v464
        %489 = vmatprep.subr.mxu0 0.0
        %490 = vmatpush1.msra.mxu0 %v465
        %491 = vmatprep.subr.mxu0 0.0
        %492 = vmatpush1.msra.mxu0 %v466
        %493 = vmatprep.subr.mxu0 0.0
        %494 = vmatpush1.msra.mxu0 %v467
        %495 = vmatprep.subr.mxu0 0.0
        %496 = vmatpush1.msra.mxu0 %v468
        %497 = vmatprep.subr.mxu0 0.0
        %498 = vmatpush1.msra.mxu0 %v469
        %499 = vmatprep.subr.mxu0 0.0
        %500 = vmatpush1.msra.mxu0 %v470
        %501 = vmatprep.subr.mxu0 0.0
        %502 = vmatpush1.msra.mxu0 %v471
        %503 = vmatprep.subr.mxu0 0.0
        %504 = vmatpush1.msra.mxu0 %v472
        %505 = vmatprep.subr.mxu0 0.0
        %506 = vmatpush1.msra.mxu0 %v473
        %507 = vmatprep.subr.mxu0 0.0
        %508 = vmatpush1.msra.mxu0 %v474
        %509 = vmatprep.subr.mxu0 0.0
        %510 = vmatpush1.msra.mxu0 %v475
        %511 = vmatprep.subr.mxu0 0.0
        %512 = vmatpush1.msra.mxu0 %v476
        %513 = vmatprep.subr.mxu0 0.0
        %514 = vmatpush1.msra.mxu0 %v477
        %515 = vmatprep.subr.mxu0 0.0
        %516 = vmatpush1.msra.mxu0 %v478
        %517 = vmatprep.subr.mxu0 0.0
        %518 = vmatpush1.msra.mxu0 %v479
        %519 = vmatprep.subr.mxu0 0.0
        %520 = vmatpush1.msra.mxu0 %v480
        %521 = vmatprep.subr.mxu0 0.0
        %522 = vmatpush1.msra.mxu0 0.0
        %523 = vmatprep.subr.mxu0 0.0
        %524 = vmatpush1.msra.mxu0 0.0
        %525 = vmatprep.subr.mxu0 0.0
        %526 = vmatpush1.msra.mxu0 0.0
        %527 = vmatprep.subr.mxu0 0.0
        %528 = vmatpush1.msra.mxu0 0.0
        %529 = vmatprep.subr.mxu0 0.0
        %530 = vmatpush1.msra.mxu0 0.0
        %531 = vmatprep.subr.mxu0 0.0
        %532 = vmatpush1.msra.mxu0 0.0
        %533 = vmatprep.subr.mxu0 0.0
        %534 = vmatpush1.msra.mxu0 0.0
        %535 = vmatprep.subr.mxu0 0.0
        %536 = vmatpush1.msra.mxu0 0.0
        %537 = vmatprep.subr.mxu0 0.0
        %538 = vmatpush1.msra.mxu0 0.0
        %539 = vmatprep.subr.mxu0 0.0
        %540 = vmatpush1.msra.mxu0 0.0
        %541 = vmatprep.subr.mxu0 0.0
        %542 = vmatpush1.msra.mxu0 0.0
        %543 = vmatprep.subr.mxu0 0.0
        %544 = vmatpush1.msra.mxu0 0.0
        %545 = vmatprep.subr.mxu0 0.0
        %546 = vmatpush1.msra.mxu0 0.0
        %547 = vmatprep.subr.mxu0 0.0
        %548 = vmatpush1.msra.mxu0 0.0
        %549 = vmatprep.mubr.f32.mxu0 %v483
        %550 = vmatmul.mubr.f32.gmra.mrb[0].mxu0 %v460
        %v551 = vpop.f32.mrb[0].mxu0
        %v552 = vadd.f32 0.0, %v551
        %v553 = vpop.f32.mrb[0].mxu0
        %554 = vdwg.mxu0
        %v555 = vadd.f32 %v462, %v552
        %s556 = scalar_lea.vmem %s3, 144
        %v557 = vld [vmem:[%s556] sm:$0xff]
        %v558 = vld [vmem:[%s556 + $0x8] sm:$0xff]
        %v559 = vld [vmem:[%s556 + $0x10] sm:$0xff]
        %v560 = vld [vmem:[%s556 + $0x18] sm:$0xff]
        %v561 = vld [vmem:[%s556 + $0x20] sm:$0xff]
        %v562 = vld [vmem:[%s556 + $0x28] sm:$0xff]
        %v563 = vld [vmem:[%s556 + $0x30] sm:$0xff]
        %v564 = vld [vmem:[%s556 + $0x38] sm:$0xff]
        %v565 = vld [vmem:[%s556 + $0x40] sm:$0xff]
        %v566 = vld [vmem:[%s556 + $0x48] sm:$0xff]
        %v567 = vld [vmem:[%s556 + $0x50] sm:$0xff]
        %v568 = vld [vmem:[%s556 + $0x58] sm:$0xff]
        %v569 = vld [vmem:[%s556 + $0x60] sm:$0xff]
        %v570 = vld [vmem:[%s556 + $0x68] sm:$0xff]
        %v571 = vld [vmem:[%s556 + $0x70] sm:$0xff]
        %v572 = vld [vmem:[%s556 + $0x78] sm:$0xff]
        %v573 = vld [vmem:[%s556 + $0x80] sm:$0xff]
        %v574 = vld [vmem:[%s556 + $0x88] sm:$0xff]
        %v576 = vrot.slane %v460, 1
        %v577 = vrot.slane %v461, 1
        %v579 = vsel %vm481, %v577, 0
        %581 = vmatprep.subr.mxu0 0.0
        %582 = vmatpush1.msra.mxu0 %v557
        %583 = vmatprep.subr.mxu0 0.0
        %584 = vmatpush1.msra.mxu0 %v558
        %585 = vmatprep.subr.mxu0 0.0
        %586 = vmatpush1.msra.mxu0 %v559
        %587 = vmatprep.subr.mxu0 0.0
        %588 = vmatpush1.msra.mxu0 %v560
        %589 = vmatprep.subr.mxu0 0.0
        %590 = vmatpush1.msra.mxu0 %v561
        %591 = vmatprep.subr.mxu0 0.0
        %592 = vmatpush1.msra.mxu0 %v562
        %593 = vmatprep.subr.mxu0 0.0
        %594 = vmatpush1.msra.mxu0 %v563
        %595 = vmatprep.subr.mxu0 0.0
        %596 = vmatpush1.msra.mxu0 %v564
        %597 = vmatprep.subr.mxu0 0.0
        %598 = vmatpush1.msra.mxu0 %v565
        %599 = vmatprep.subr.mxu0 0.0
        %600 = vmatpush1.msra.mxu0 %v566
        %601 = vmatprep.subr.mxu0 0.0
        %602 = vmatpush1.msra.mxu0 %v567
        %603 = vmatprep.subr.mxu0 0.0
        %604 = vmatpush1.msra.mxu0 %v568
        %605 = vmatprep.subr.mxu0 0.0
        %606 = vmatpush1.msra.mxu0 %v569
        %607 = vmatprep.subr.mxu0 0.0
        %608 = vmatpush1.msra.mxu0 %v570
        %609 = vmatprep.subr.mxu0 0.0
        %610 = vmatpush1.msra.mxu0 %v571
        %611 = vmatprep.subr.mxu0 0.0
        %612 = vmatpush1.msra.mxu0 %v572
        %613 = vmatprep.subr.mxu0 0.0
        %614 = vmatpush1.msra.mxu0 %v573
        %615 = vmatprep.subr.mxu0 0.0
        %616 = vmatpush1.msra.mxu0 %v574
        %617 = vmatprep.subr.mxu0 0.0
        %618 = vmatpush1.msra.mxu0 0.0
        %619 = vmatprep.subr.mxu0 0.0
        %620 = vmatpush1.msra.mxu0 0.0
        %621 = vmatprep.subr.mxu0 0.0
        %622 = vmatpush1.msra.mxu0 0.0
        %623 = vmatprep.subr.mxu0 0.0
        %624 = vmatpush1.msra.mxu0 0.0
        %625 = vmatprep.subr.mxu0 0.0
        %626 = vmatpush1.msra.mxu0 0.0
        %627 = vmatprep.subr.mxu0 0.0
        %628 = vmatpush1.msra.mxu0 0.0
        %629 = vmatprep.subr.mxu0 0.0
        %630 = vmatpush1.msra.mxu0 0.0
        %631 = vmatprep.subr.mxu0 0.0
        %632 = vmatpush1.msra.mxu0 0.0
        %633 = vmatprep.subr.mxu0 0.0
        %634 = vmatpush1.msra.mxu0 0.0
        %635 = vmatprep.subr.mxu0 0.0
        %636 = vmatpush1.msra.mxu0 0.0
        %637 = vmatprep.subr.mxu0 0.0
        %638 = vmatpush1.msra.mxu0 0.0
        %639 = vmatprep.subr.mxu0 0.0
        %640 = vmatpush1.msra.mxu0 0.0
        %641 = vmatprep.subr.mxu0 0.0
        %642 = vmatpush1.msra.mxu0 0.0
        %643 = vmatprep.subr.mxu0 0.0
        %644 = vmatpush1.msra.mxu0 0.0
        %645 = vmatprep.mubr.f32.mxu0 %v579
        %646 = vmatmul.mubr.f32.gmra.mrb[0].mxu0 %v576
        %v647 = vpop.f32.mrb[0].mxu0
        %v648 = vadd.f32 0.0, %v647
        %v649 = vpop.f32.mrb[0].mxu0
        %650 = vdwg.mxu0
        %v651 = vadd.f32 %v555, %v648
        %s652 = scalar_lea.vmem %s3, 288
        %v653 = vld [vmem:[%s652] sm:$0xff]
        %v654 = vld [vmem:[%s652 + $0x8] sm:$0xff]
        %v655 = vld [vmem:[%s652 + $0x10] sm:$0xff]
        %v656 = vld [vmem:[%s652 + $0x18] sm:$0xff]
        %v657 = vld [vmem:[%s652 + $0x20] sm:$0xff]
        %v658 = vld [vmem:[%s652 + $0x28] sm:$0xff]
        %v659 = vld [vmem:[%s652 + $0x30] sm:$0xff]
        %v660 = vld [vmem:[%s652 + $0x38] sm:$0xff]
        %v661 = vld [vmem:[%s652 + $0x40] sm:$0xff]
        %v662 = vld [vmem:[%s652 + $0x48] sm:$0xff]
        %v663 = vld [vmem:[%s652 + $0x50] sm:$0xff]
        %v664 = vld [vmem:[%s652 + $0x58] sm:$0xff]
        %v665 = vld [vmem:[%s652 + $0x60] sm:$0xff]
        %v666 = vld [vmem:[%s652 + $0x68] sm:$0xff]
        %v667 = vld [vmem:[%s652 + $0x70] sm:$0xff]
        %v668 = vld [vmem:[%s652 + $0x78] sm:$0xff]
        %v669 = vld [vmem:[%s652 + $0x80] sm:$0xff]
        %v670 = vld [vmem:[%s652 + $0x88] sm:$0xff]
        %v671 = vrot.slane %v460, 2
        %v672 = vrot.slane %v461, 2
        %v674 = vsel %vm481, %v672, 0
        %676 = vmatprep.subr.mxu0 0.0
        %677 = vmatpush1.msra.mxu0 %v653
        %678 = vmatprep.subr.mxu0 0.0
        %679 = vmatpush1.msra.mxu0 %v654
        %680 = vmatprep.subr.mxu0 0.0
        %681 = vmatpush1.msra.mxu0 %v655
        %682 = vmatprep.subr.mxu0 0.0
        %683 = vmatpush1.msra.mxu0 %v656
        %684 = vmatprep.subr.mxu0 0.0
        %685 = vmatpush1.msra.mxu0 %v657
        %686 = vmatprep.subr.mxu0 0.0
        %687 = vmatpush1.msra.mxu0 %v658
        %688 = vmatprep.subr.mxu0 0.0
        %689 = vmatpush1.msra.mxu0 %v659
        %690 = vmatprep.subr.mxu0 0.0
        %691 = vmatpush1.msra.mxu0 %v660
        %692 = vmatprep.subr.mxu0 0.0
        %693 = vmatpush1.msra.mxu0 %v661
        %694 = vmatprep.subr.mxu0 0.0
        %695 = vmatpush1.msra.mxu0 %v662
        %696 = vmatprep.subr.mxu0 0.0
        %697 = vmatpush1.msra.mxu0 %v663
        %698 = vmatprep.subr.mxu0 0.0
        %699 = vmatpush1.msra.mxu0 %v664
        %700 = vmatprep.subr.mxu0 0.0
        %701 = vmatpush1.msra.mxu0 %v665
        %702 = vmatprep.subr.mxu0 0.0
        %703 = vmatpush1.msra.mxu0 %v666
        %704 = vmatprep.subr.mxu0 0.0
        %705 = vmatpush1.msra.mxu0 %v667
        %706 = vmatprep.subr.mxu0 0.0
        %707 = vmatpush1.msra.mxu0 %v668
        %708 = vmatprep.subr.mxu0 0.0
        %709 = vmatpush1.msra.mxu0 %v669
        %710 = vmatprep.subr.mxu0 0.0
        %711 = vmatpush1.msra.mxu0 %v670
        %712 = vmatprep.subr.mxu0 0.0
        %713 = vmatpush1.msra.mxu0 0.0
        %714 = vmatprep.subr.mxu0 0.0
        %715 = vmatpush1.msra.mxu0 0.0
        %716 = vmatprep.subr.mxu0 0.0
        %717 = vmatpush1.msra.mxu0 0.0
        %718 = vmatprep.subr.mxu0 0.0
        %719 = vmatpush1.msra.mxu0 0.0
        %720 = vmatprep.subr.mxu0 0.0
        %721 = vmatpush1.msra.mxu0 0.0
        %722 = vmatprep.subr.mxu0 0.0
        %723 = vmatpush1.msra.mxu0 0.0
        %724 = vmatprep.subr.mxu0 0.0
        %725 = vmatpush1.msra.mxu0 0.0
        %726 = vmatprep.subr.mxu0 0.0
        %727 = vmatpush1.msra.mxu0 0.0
        %728 = vmatprep.subr.mxu0 0.0
        %729 = vmatpush1.msra.mxu0 0.0
        %730 = vmatprep.subr.mxu0 0.0
        %731 = vmatpush1.msra.mxu0 0.0
        %732 = vmatprep.subr.mxu0 0.0
        %733 = vmatpush1.msra.mxu0 0.0
        %734 = vmatprep.subr.mxu0 0.0
        %735 = vmatpush1.msra.mxu0 0.0
        %736 = vmatprep.subr.mxu0 0.0
        %737 = vmatpush1.msra.mxu0 0.0
        %738 = vmatprep.subr.mxu0 0.0
        %739 = vmatpush1.msra.mxu0 0.0
        %740 = vmatprep.mubr.f32.mxu0 %v674
        %741 = vmatmul.mubr.f32.gmra.mrb[0].mxu0 %v671
        %v742 = vpop.f32.mrb[0].mxu0
        %v743 = vadd.f32 0.0, %v742
        %v744 = vpop.f32.mrb[0].mxu0
        %745 = vdwg.mxu0
        %v746 = vadd.f32 %v651, %v743
        %s747 = scalar_lea.vmem %s3, 432
        %v748 = vld [vmem:[%s747] sm:$0xff]
        %v749 = vld [vmem:[%s747 + $0x8] sm:$0xff]
        %v750 = vld [vmem:[%s747 + $0x10] sm:$0xff]
        %v751 = vld [vmem:[%s747 + $0x18] sm:$0xff]
        %v752 = vld [vmem:[%s747 + $0x20] sm:$0xff]
        %v753 = vld [vmem:[%s747 + $0x28] sm:$0xff]
        %v754 = vld [vmem:[%s747 + $0x30] sm:$0xff]
        %v755 = vld [vmem:[%s747 + $0x38] sm:$0xff]
        %v756 = vld [vmem:[%s747 + $0x40] sm:$0xff]
        %v757 = vld [vmem:[%s747 + $0x48] sm:$0xff]
        %v758 = vld [vmem:[%s747 + $0x50] sm:$0xff]
        %v759 = vld [vmem:[%s747 + $0x58] sm:$0xff]
        %v760 = vld [vmem:[%s747 + $0x60] sm:$0xff]
        %v761 = vld [vmem:[%s747 + $0x68] sm:$0xff]
        %v762 = vld [vmem:[%s747 + $0x70] sm:$0xff]
        %v763 = vld [vmem:[%s747 + $0x78] sm:$0xff]
        %v764 = vld [vmem:[%s747 + $0x80] sm:$0xff]
        %v765 = vld [vmem:[%s747 + $0x88] sm:$0xff]
        %v766 = vrot.slane %v460, 3
        %v767 = vrot.slane %v461, 3
        %v769 = vsel %vm481, %v767, 0
        %771 = vmatprep.subr.mxu0 0.0
        %772 = vmatpush1.msra.mxu0 %v748
        %773 = vmatprep.subr.mxu0 0.0
        %774 = vmatpush1.msra.mxu0 %v749
        %775 = vmatprep.subr.mxu0 0.0
        %776 = vmatpush1.msra.mxu0 %v750
        %777 = vmatprep.subr.mxu0 0.0
        %778 = vmatpush1.msra.mxu0 %v751
        %779 = vmatprep.subr.mxu0 0.0
        %780 = vmatpush1.msra.mxu0 %v752
        %781 = vmatprep.subr.mxu0 0.0
        %782 = vmatpush1.msra.mxu0 %v753
        %783 = vmatprep.subr.mxu0 0.0
        %784 = vmatpush1.msra.mxu0 %v754
        %785 = vmatprep.subr.mxu0 0.0
        %786 = vmatpush1.msra.mxu0 %v755
        %787 = vmatprep.subr.mxu0 0.0
        %788 = vmatpush1.msra.mxu0 %v756
        %789 = vmatprep.subr.mxu0 0.0
        %790 = vmatpush1.msra.mxu0 %v757
        %791 = vmatprep.subr.mxu0 0.0
        %792 = vmatpush1.msra.mxu0 %v758
        %793 = vmatprep.subr.mxu0 0.0
        %794 = vmatpush1.msra.mxu0 %v759
        %795 = vmatprep.subr.mxu0 0.0
        %796 = vmatpush1.msra.mxu0 %v760
        %797 = vmatprep.subr.mxu0 0.0
        %798 = vmatpush1.msra.mxu0 %v761
        %799 = vmatprep.subr.mxu0 0.0
        %800 = vmatpush1.msra.mxu0 %v762
        %801 = vmatprep.subr.mxu0 0.0
        %802 = vmatpush1.msra.mxu0 %v763
        %803 = vmatprep.subr.mxu0 0.0
        %804 = vmatpush1.msra.mxu0 %v764
        %805 = vmatprep.subr.mxu0 0.0
        %806 = vmatpush1.msra.mxu0 %v765
        %807 = vmatprep.subr.mxu0 0.0
        %808 = vmatpush1.msra.mxu0 0.0
        %809 = vmatprep.subr.mxu0 0.0
        %810 = vmatpush1.msra.mxu0 0.0
        %811 = vmatprep.subr.mxu0 0.0
        %812 = vmatpush1.msra.mxu0 0.0
        %813 = vmatprep.subr.mxu0 0.0
        %814 = vmatpush1.msra.mxu0 0.0
        %815 = vmatprep.subr.mxu0 0.0
        %816 = vmatpush1.msra.mxu0 0.0
        %817 = vmatprep.subr.mxu0 0.0
        %818 = vmatpush1.msra.mxu0 0.0
        %819 = vmatprep.subr.mxu0 0.0
        %820 = vmatpush1.msra.mxu0 0.0
        %821 = vmatprep.subr.mxu0 0.0
        %822 = vmatpush1.msra.mxu0 0.0
        %823 = vmatprep.subr.mxu0 0.0
        %824 = vmatpush1.msra.mxu0 0.0
        %825 = vmatprep.subr.mxu0 0.0
        %826 = vmatpush1.msra.mxu0 0.0
        %827 = vmatprep.subr.mxu0 0.0
        %828 = vmatpush1.msra.mxu0 0.0
        %829 = vmatprep.subr.mxu0 0.0
        %830 = vmatpush1.msra.mxu0 0.0
        %831 = vmatprep.subr.mxu0 0.0
        %832 = vmatpush1.msra.mxu0 0.0
        %833 = vmatprep.subr.mxu0 0.0
        %834 = vmatpush1.msra.mxu0 0.0
        %835 = vmatprep.mubr.f32.mxu0 %v769
        %836 = vmatmul.mubr.f32.gmra.mrb[0].mxu0 %v766
        %v837 = vpop.f32.mrb[0].mxu0
        %v838 = vadd.f32 0.0, %v837
        %v839 = vpop.f32.mrb[0].mxu0
        %840 = vdwg.mxu0
        %v841 = vadd.f32 %v746, %v838
        %s842 = scalar_lea.vmem %s3, 576
        %v843 = vld [vmem:[%s842] sm:$0xff]
        %v844 = vld [vmem:[%s842 + $0x8] sm:$0xff]
        %v845 = vld [vmem:[%s842 + $0x10] sm:$0xff]
        %v846 = vld [vmem:[%s842 + $0x18] sm:$0xff]
        %v847 = vld [vmem:[%s842 + $0x20] sm:$0xff]
        %v848 = vld [vmem:[%s842 + $0x28] sm:$0xff]
        %v849 = vld [vmem:[%s842 + $0x30] sm:$0xff]
        %v850 = vld [vmem:[%s842 + $0x38] sm:$0xff]
        %v851 = vld [vmem:[%s842 + $0x40] sm:$0xff]
        %v852 = vld [vmem:[%s842 + $0x48] sm:$0xff]
        %v853 = vld [vmem:[%s842 + $0x50] sm:$0xff]
        %v854 = vld [vmem:[%s842 + $0x58] sm:$0xff]
        %v855 = vld [vmem:[%s842 + $0x60] sm:$0xff]
        %v856 = vld [vmem:[%s842 + $0x68] sm:$0xff]
        %v857 = vld [vmem:[%s842 + $0x70] sm:$0xff]
        %v858 = vld [vmem:[%s842 + $0x78] sm:$0xff]
        %v859 = vld [vmem:[%s842 + $0x80] sm:$0xff]
        %v860 = vld [vmem:[%s842 + $0x88] sm:$0xff]
        %v861 = vrot.slane %v460, 4
        %v862 = vrot.slane %v461, 4
        %v864 = vsel %vm481, %v862, 0
        %866 = vmatprep.subr.mxu0 0.0
        %867 = vmatpush1.msra.mxu0 %v843
        %868 = vmatprep.subr.mxu0 0.0
        %869 = vmatpush1.msra.mxu0 %v844
        %870 = vmatprep.subr.mxu0 0.0
        %871 = vmatpush1.msra.mxu0 %v845
        %872 = vmatprep.subr.mxu0 0.0
        %873 = vmatpush1.msra.mxu0 %v846
        %874 = vmatprep.subr.mxu0 0.0
        %875 = vmatpush1.msra.mxu0 %v847
        %876 = vmatprep.subr.mxu0 0.0
        %877 = vmatpush1.msra.mxu0 %v848
        %878 = vmatprep.subr.mxu0 0.0
        %879 = vmatpush1.msra.mxu0 %v849
        %880 = vmatprep.subr.mxu0 0.0
        %881 = vmatpush1.msra.mxu0 %v850
        %882 = vmatprep.subr.mxu0 0.0
        %883 = vmatpush1.msra.mxu0 %v851
        %884 = vmatprep.subr.mxu0 0.0
        %885 = vmatpush1.msra.mxu0 %v852
        %886 = vmatprep.subr.mxu0 0.0
        %887 = vmatpush1.msra.mxu0 %v853
        %888 = vmatprep.subr.mxu0 0.0
        %889 = vmatpush1.msra.mxu0 %v854
        %890 = vmatprep.subr.mxu0 0.0
        %891 = vmatpush1.msra.mxu0 %v855
        %892 = vmatprep.subr.mxu0 0.0
        %893 = vmatpush1.msra.mxu0 %v856
        %894 = vmatprep.subr.mxu0 0.0
        %895 = vmatpush1.msra.mxu0 %v857
        %896 = vmatprep.subr.mxu0 0.0
        %897 = vmatpush1.msra.mxu0 %v858
        %898 = vmatprep.subr.mxu0 0.0
        %899 = vmatpush1.msra.mxu0 %v859
        %900 = vmatprep.subr.mxu0 0.0
        %901 = vmatpush1.msra.mxu0 %v860
        %902 = vmatprep.subr.mxu0 0.0
        %903 = vmatpush1.msra.mxu0 0.0
        %904 = vmatprep.subr.mxu0 0.0
        %905 = vmatpush1.msra.mxu0 0.0
        %906 = vmatprep.subr.mxu0 0.0
        %907 = vmatpush1.msra.mxu0 0.0
        %908 = vmatprep.subr.mxu0 0.0
        %909 = vmatpush1.msra.mxu0 0.0
        %910 = vmatprep.subr.mxu0 0.0
        %911 = vmatpush1.msra.mxu0 0.0
        %912 = vmatprep.subr.mxu0 0.0
        %913 = vmatpush1.msra.mxu0 0.0
        %914 = vmatprep.subr.mxu0 0.0
        %915 = vmatpush1.msra.mxu0 0.0
        %916 = vmatprep.subr.mxu0 0.0
        %917 = vmatpush1.msra.mxu0 0.0
        %918 = vmatprep.subr.mxu0 0.0
        %919 = vmatpush1.msra.mxu0 0.0
        %920 = vmatprep.subr.mxu0 0.0
        %921 = vmatpush1.msra.mxu0 0.0
        %922 = vmatprep.subr.mxu0 0.0
        %923 = vmatpush1.msra.mxu0 0.0
        %924 = vmatprep.subr.mxu0 0.0
        %925 = vmatpush1.msra.mxu0 0.0
        %926 = vmatprep.subr.mxu0 0.0
        %927 = vmatpush1.msra.mxu0 0.0
        %928 = vmatprep.subr.mxu0 0.0
        %929 = vmatpush1.msra.mxu0 0.0
        %930 = vmatprep.mubr.f32.mxu0 %v864
        %931 = vmatmul.mubr.f32.gmra.mrb[0].mxu0 %v861
        %v932 = vpop.f32.mrb[0].mxu0
        %v933 = vadd.f32 0.0, %v932
        %v934 = vpop.f32.mrb[0].mxu0
        %935 = vdwg.mxu0
        %v936 = vadd.f32 %v841, %v933
        %s937 = scalar_lea.vmem %s3, 720
        %v938 = vld [vmem:[%s937] sm:$0xff]
        %v939 = vld [vmem:[%s937 + $0x8] sm:$0xff]
        %v940 = vld [vmem:[%s937 + $0x10] sm:$0xff]
        %v941 = vld [vmem:[%s937 + $0x18] sm:$0xff]
        %v942 = vld [vmem:[%s937 + $0x20] sm:$0xff]
        %v943 = vld [vmem:[%s937 + $0x28] sm:$0xff]
        %v944 = vld [vmem:[%s937 + $0x30] sm:$0xff]
        %v945 = vld [vmem:[%s937 + $0x38] sm:$0xff]
        %v946 = vld [vmem:[%s937 + $0x40] sm:$0xff]
        %v947 = vld [vmem:[%s937 + $0x48] sm:$0xff]
        %v948 = vld [vmem:[%s937 + $0x50] sm:$0xff]
        %v949 = vld [vmem:[%s937 + $0x58] sm:$0xff]
        %v950 = vld [vmem:[%s937 + $0x60] sm:$0xff]
        %v951 = vld [vmem:[%s937 + $0x68] sm:$0xff]
        %v952 = vld [vmem:[%s937 + $0x70] sm:$0xff]
        %v953 = vld [vmem:[%s937 + $0x78] sm:$0xff]
        %v954 = vld [vmem:[%s937 + $0x80] sm:$0xff]
        %v955 = vld [vmem:[%s937 + $0x88] sm:$0xff]
        %v956 = vrot.slane %v460, 5
        %v957 = vrot.slane %v461, 5
        %v959 = vsel %vm481, %v957, 0
        %961 = vmatprep.subr.mxu0 0.0
        %962 = vmatpush1.msra.mxu0 %v938
        %963 = vmatprep.subr.mxu0 0.0
        %964 = vmatpush1.msra.mxu0 %v939
        %965 = vmatprep.subr.mxu0 0.0
        %966 = vmatpush1.msra.mxu0 %v940
        %967 = vmatprep.subr.mxu0 0.0
        %968 = vmatpush1.msra.mxu0 %v941
        %969 = vmatprep.subr.mxu0 0.0
        %970 = vmatpush1.msra.mxu0 %v942
        %971 = vmatprep.subr.mxu0 0.0
        %972 = vmatpush1.msra.mxu0 %v943
        %973 = vmatprep.subr.mxu0 0.0
        %974 = vmatpush1.msra.mxu0 %v944
        %975 = vmatprep.subr.mxu0 0.0
        %976 = vmatpush1.msra.mxu0 %v945
        %977 = vmatprep.subr.mxu0 0.0
        %978 = vmatpush1.msra.mxu0 %v946
        %979 = vmatprep.subr.mxu0 0.0
        %980 = vmatpush1.msra.mxu0 %v947
        %981 = vmatprep.subr.mxu0 0.0
        %982 = vmatpush1.msra.mxu0 %v948
        %983 = vmatprep.subr.mxu0 0.0
        %984 = vmatpush1.msra.mxu0 %v949
        %985 = vmatprep.subr.mxu0 0.0
        %986 = vmatpush1.msra.mxu0 %v950
        %987 = vmatprep.subr.mxu0 0.0
        %988 = vmatpush1.msra.mxu0 %v951
        %989 = vmatprep.subr.mxu0 0.0
        %990 = vmatpush1.msra.mxu0 %v952
        %991 = vmatprep.subr.mxu0 0.0
        %992 = vmatpush1.msra.mxu0 %v953
        %993 = vmatprep.subr.mxu0 0.0
        %994 = vmatpush1.msra.mxu0 %v954
        %995 = vmatprep.subr.mxu0 0.0
        %996 = vmatpush1.msra.mxu0 %v955
        %997 = vmatprep.subr.mxu0 0.0
        %998 = vmatpush1.msra.mxu0 0.0
        %999 = vmatprep.subr.mxu0 0.0
        %1000 = vmatpush1.msra.mxu0 0.0
        %1001 = vmatprep.subr.mxu0 0.0
        %1002 = vmatpush1.msra.mxu0 0.0
        %1003 = vmatprep.subr.mxu0 0.0
        %1004 = vmatpush1.msra.mxu0 0.0
        %1005 = vmatprep.subr.mxu0 0.0
        %1006 = vmatpush1.msra.mxu0 0.0
        %1007 = vmatprep.subr.mxu0 0.0
        %1008 = vmatpush1.msra.mxu0 0.0
        %1009 = vmatprep.subr.mxu0 0.0
        %1010 = vmatpush1.msra.mxu0 0.0
        %1011 = vmatprep.subr.mxu0 0.0
        %1012 = vmatpush1.msra.mxu0 0.0
        %1013 = vmatprep.subr.mxu0 0.0
        %1014 = vmatpush1.msra.mxu0 0.0
        %1015 = vmatprep.subr.mxu0 0.0
        %1016 = vmatpush1.msra.mxu0 0.0
        %1017 = vmatprep.subr.mxu0 0.0
        %1018 = vmatpush1.msra.mxu0 0.0
        %1019 = vmatprep.subr.mxu0 0.0
        %1020 = vmatpush1.msra.mxu0 0.0
        %1021 = vmatprep.subr.mxu0 0.0
        %1022 = vmatpush1.msra.mxu0 0.0
        %1023 = vmatprep.subr.mxu0 0.0
        %1024 = vmatpush1.msra.mxu0 0.0
        %1025 = vmatprep.mubr.f32.mxu0 %v959
        %1026 = vmatmul.mubr.f32.gmra.mrb[0].mxu0 %v956
        %v1027 = vpop.f32.mrb[0].mxu0
        %v1028 = vadd.f32 0.0, %v1027
        %v1029 = vpop.f32.mrb[0].mxu0
        %1030 = vdwg.mxu0
        %v1031 = vadd.f32 %v936, %v1028
        %s1032 = scalar_lea.vmem %s3, 864
        %v1033 = vld [vmem:[%s1032] sm:$0xff]
        %v1034 = vld [vmem:[%s1032 + $0x8] sm:$0xff]
        %v1035 = vld [vmem:[%s1032 + $0x10] sm:$0xff]
        %v1036 = vld [vmem:[%s1032 + $0x18] sm:$0xff]
        %v1037 = vld [vmem:[%s1032 + $0x20] sm:$0xff]
        %v1038 = vld [vmem:[%s1032 + $0x28] sm:$0xff]
        %v1039 = vld [vmem:[%s1032 + $0x30] sm:$0xff]
        %v1040 = vld [vmem:[%s1032 + $0x38] sm:$0xff]
        %v1041 = vld [vmem:[%s1032 + $0x40] sm:$0xff]
        %v1042 = vld [vmem:[%s1032 + $0x48] sm:$0xff]
        %v1043 = vld [vmem:[%s1032 + $0x50] sm:$0xff]
        %v1044 = vld [vmem:[%s1032 + $0x58] sm:$0xff]
        %v1045 = vld [vmem:[%s1032 + $0x60] sm:$0xff]
        %v1046 = vld [vmem:[%s1032 + $0x68] sm:$0xff]
        %v1047 = vld [vmem:[%s1032 + $0x70] sm:$0xff]
        %v1048 = vld [vmem:[%s1032 + $0x78] sm:$0xff]
        %v1049 = vld [vmem:[%s1032 + $0x80] sm:$0xff]
        %v1050 = vld [vmem:[%s1032 + $0x88] sm:$0xff]
        %v1051 = vrot.slane %v460, 6
        %v1052 = vrot.slane %v461, 6
        %v1054 = vsel %vm481, %v1052, 0
        %1056 = vmatprep.subr.mxu0 0.0
        %1057 = vmatpush1.msra.mxu0 %v1033
        %1058 = vmatprep.subr.mxu0 0.0
        %1059 = vmatpush1.msra.mxu0 %v1034
        %1060 = vmatprep.subr.mxu0 0.0
        %1061 = vmatpush1.msra.mxu0 %v1035
        %1062 = vmatprep.subr.mxu0 0.0
        %1063 = vmatpush1.msra.mxu0 %v1036
        %1064 = vmatprep.subr.mxu0 0.0
        %1065 = vmatpush1.msra.mxu0 %v1037
        %1066 = vmatprep.subr.mxu0 0.0
        %1067 = vmatpush1.msra.mxu0 %v1038
        %1068 = vmatprep.subr.mxu0 0.0
        %1069 = vmatpush1.msra.mxu0 %v1039
        %1070 = vmatprep.subr.mxu0 0.0
        %1071 = vmatpush1.msra.mxu0 %v1040
        %1072 = vmatprep.subr.mxu0 0.0
        %1073 = vmatpush1.msra.mxu0 %v1041
        %1074 = vmatprep.subr.mxu0 0.0
        %1075 = vmatpush1.msra.mxu0 %v1042
        %1076 = vmatprep.subr.mxu0 0.0
        %1077 = vmatpush1.msra.mxu0 %v1043
        %1078 = vmatprep.subr.mxu0 0.0
        %1079 = vmatpush1.msra.mxu0 %v1044
        %1080 = vmatprep.subr.mxu0 0.0
        %1081 = vmatpush1.msra.mxu0 %v1045
        %1082 = vmatprep.subr.mxu0 0.0
        %1083 = vmatpush1.msra.mxu0 %v1046
        %1084 = vmatprep.subr.mxu0 0.0
        %1085 = vmatpush1.msra.mxu0 %v1047
        %1086 = vmatprep.subr.mxu0 0.0
        %1087 = vmatpush1.msra.mxu0 %v1048
        %1088 = vmatprep.subr.mxu0 0.0
        %1089 = vmatpush1.msra.mxu0 %v1049
        %1090 = vmatprep.subr.mxu0 0.0
        %1091 = vmatpush1.msra.mxu0 %v1050
        %1092 = vmatprep.subr.mxu0 0.0
        %1093 = vmatpush1.msra.mxu0 0.0
        %1094 = vmatprep.subr.mxu0 0.0
        %1095 = vmatpush1.msra.mxu0 0.0
        %1096 = vmatprep.subr.mxu0 0.0
        %1097 = vmatpush1.msra.mxu0 0.0
        %1098 = vmatprep.subr.mxu0 0.0
        %1099 = vmatpush1.msra.mxu0 0.0
        %1100 = vmatprep.subr.mxu0 0.0
        %1101 = vmatpush1.msra.mxu0 0.0
        %1102 = vmatprep.subr.mxu0 0.0
        %1103 = vmatpush1.msra.mxu0 0.0
        %1104 = vmatprep.subr.mxu0 0.0
        %1105 = vmatpush1.msra.mxu0 0.0
        %1106 = vmatprep.subr.mxu0 0.0
        %1107 = vmatpush1.msra.mxu0 0.0
        %1108 = vmatprep.subr.mxu0 0.0
        %1109 = vmatpush1.msra.mxu0 0.0
        %1110 = vmatprep.subr.mxu0 0.0
        %1111 = vmatpush1.msra.mxu0 0.0
        %1112 = vmatprep.subr.mxu0 0.0
        %1113 = vmatpush1.msra.mxu0 0.0
        %1114 = vmatprep.subr.mxu0 0.0
        %1115 = vmatpush1.msra.mxu0 0.0
        %1116 = vmatprep.subr.mxu0 0.0
        %1117 = vmatpush1.msra.mxu0 0.0
        %1118 = vmatprep.subr.mxu0 0.0
        %1119 = vmatpush1.msra.mxu0 0.0
        %1120 = vmatprep.mubr.f32.mxu0 %v1054
        %1121 = vmatmul.mubr.f32.gmra.mrb[0].mxu0 %v1051
        %v1122 = vpop.f32.mrb[0].mxu0
        %v1123 = vadd.f32 0.0, %v1122
        %v1124 = vpop.f32.mrb[0].mxu0
        %1125 = vdwg.mxu0
        %v1126 = vadd.f32 %v1031, %v1123
        %s1127 = scalar_lea.vmem %s3, 1008
        %v1128 = vld [vmem:[%s1127] sm:$0xff]
        %v1129 = vld [vmem:[%s1127 + $0x8] sm:$0xff]
        %v1130 = vld [vmem:[%s1127 + $0x10] sm:$0xff]
        %v1131 = vld [vmem:[%s1127 + $0x18] sm:$0xff]
        %v1132 = vld [vmem:[%s1127 + $0x20] sm:$0xff]
        %v1133 = vld [vmem:[%s1127 + $0x28] sm:$0xff]
        %v1134 = vld [vmem:[%s1127 + $0x30] sm:$0xff]
        %v1135 = vld [vmem:[%s1127 + $0x38] sm:$0xff]
        %v1136 = vld [vmem:[%s1127 + $0x40] sm:$0xff]
        %v1137 = vld [vmem:[%s1127 + $0x48] sm:$0xff]
        %v1138 = vld [vmem:[%s1127 + $0x50] sm:$0xff]
        %v1139 = vld [vmem:[%s1127 + $0x58] sm:$0xff]
        %v1140 = vld [vmem:[%s1127 + $0x60] sm:$0xff]
        %v1141 = vld [vmem:[%s1127 + $0x68] sm:$0xff]
        %v1142 = vld [vmem:[%s1127 + $0x70] sm:$0xff]
        %v1143 = vld [vmem:[%s1127 + $0x78] sm:$0xff]
        %v1144 = vld [vmem:[%s1127 + $0x80] sm:$0xff]
        %v1145 = vld [vmem:[%s1127 + $0x88] sm:$0xff]
        %v1146 = vrot.slane %v460, 7
        %v1147 = vrot.slane %v461, 7
        %v1149 = vsel %vm481, %v1147, 0
        %1151 = vmatprep.subr.mxu0 0.0
        %1152 = vmatpush1.msra.mxu0 %v1128
        %1153 = vmatprep.subr.mxu0 0.0
        %1154 = vmatpush1.msra.mxu0 %v1129
        %1155 = vmatprep.subr.mxu0 0.0
        %1156 = vmatpush1.msra.mxu0 %v1130
        %1157 = vmatprep.subr.mxu0 0.0
        %1158 = vmatpush1.msra.mxu0 %v1131
        %1159 = vmatprep.subr.mxu0 0.0
        %1160 = vmatpush1.msra.mxu0 %v1132
        %1161 = vmatprep.subr.mxu0 0.0
        %1162 = vmatpush1.msra.mxu0 %v1133
        %1163 = vmatprep.subr.mxu0 0.0
        %1164 = vmatpush1.msra.mxu0 %v1134
        %1165 = vmatprep.subr.mxu0 0.0
        %1166 = vmatpush1.msra.mxu0 %v1135
        %1167 = vmatprep.subr.mxu0 0.0
        %1168 = vmatpush1.msra.mxu0 %v1136
        %1169 = vmatprep.subr.mxu0 0.0
        %1170 = vmatpush1.msra.mxu0 %v1137
        %1171 = vmatprep.subr.mxu0 0.0
        %1172 = vmatpush1.msra.mxu0 %v1138
        %1173 = vmatprep.subr.mxu0 0.0
        %1174 = vmatpush1.msra.mxu0 %v1139
        %1175 = vmatprep.subr.mxu0 0.0
        %1176 = vmatpush1.msra.mxu0 %v1140
        %1177 = vmatprep.subr.mxu0 0.0
        %1178 = vmatpush1.msra.mxu0 %v1141
        %1179 = vmatprep.subr.mxu0 0.0
        %1180 = vmatpush1.msra.mxu0 %v1142
        %1181 = vmatprep.subr.mxu0 0.0
        %1182 = vmatpush1.msra.mxu0 %v1143
        %1183 = vmatprep.subr.mxu0 0.0
        %1184 = vmatpush1.msra.mxu0 %v1144
        %1185 = vmatprep.subr.mxu0 0.0
        %1186 = vmatpush1.msra.mxu0 %v1145
        %1187 = vmatprep.subr.mxu0 0.0
        %1188 = vmatpush1.msra.mxu0 0.0
        %1189 = vmatprep.subr.mxu0 0.0
        %1190 = vmatpush1.msra.mxu0 0.0
        %1191 = vmatprep.subr.mxu0 0.0
        %1192 = vmatpush1.msra.mxu0 0.0
        %1193 = vmatprep.subr.mxu0 0.0
        %1194 = vmatpush1.msra.mxu0 0.0
        %1195 = vmatprep.subr.mxu0 0.0
        %1196 = vmatpush1.msra.mxu0 0.0
        %1197 = vmatprep.subr.mxu0 0.0
        %1198 = vmatpush1.msra.mxu0 0.0
        %1199 = vmatprep.subr.mxu0 0.0
        %1200 = vmatpush1.msra.mxu0 0.0
        %1201 = vmatprep.subr.mxu0 0.0
        %1202 = vmatpush1.msra.mxu0 0.0
        %1203 = vmatprep.subr.mxu0 0.0
        %1204 = vmatpush1.msra.mxu0 0.0
        %1205 = vmatprep.subr.mxu0 0.0
        %1206 = vmatpush1.msra.mxu0 0.0
        %1207 = vmatprep.subr.mxu0 0.0
        %1208 = vmatpush1.msra.mxu0 0.0
        %1209 = vmatprep.subr.mxu0 0.0
        %1210 = vmatpush1.msra.mxu0 0.0
        %1211 = vmatprep.subr.mxu0 0.0
        %1212 = vmatpush1.msra.mxu0 0.0
        %1213 = vmatprep.subr.mxu0 0.0
        %1214 = vmatpush1.msra.mxu0 0.0
        %1215 = vmatprep.mubr.f32.mxu0 %v1149
        %1216 = vmatmul.mubr.f32.gmra.mrb[0].mxu0 %v1146
        %v1217 = vpop.f32.mrb[0].mxu0
        %v1218 = vadd.f32 0.0, %v1217
        %v1219 = vpop.f32.mrb[0].mxu0
        %1220 = vdwg.mxu0
        %v1221 = vadd.f32 %v1126, %v1218
        %vm1222 = vcmask 1040384
        %v1223 = vsel %vm1222, %v1221, -inf
        %1224 = vmax.xlane.f32.xlu0 %v1223
        %v1225 = vpop.xlane.xlu0 %1224
        %v1226 = vsub.f32 %v1221, %v1225
        %v1227 = vmul.f32 %v1226, 1.442695
        %v1228 = vpow.pop %v1227
        %v1229 = vsel %vm1222, %v1228, 0.0
        %1230 = vadd.xlane.f32.xlu0 %v1229
        %v1231 = vpop.xlane.xlu0 %1230
        %v1232 = vlog2.pop %v1231
        %v1233 = vmul.f32 %v1232, 0.6931472
        %v1234 = vsub.f32 %v1226, %v1233
        %1235 = vst [vmem:[%s216] sm:$0x1] %v1234
        %s1236 = sand.u32 %s137, 1
        %s1237 = scalar_lea.sflag [#allocation3], %s1236
        %s1238 = sand.u32 %s137, 1
        %s1239 = scalar_lea.vmem [#allocation2], %s1238
        // Predicated region
        $region41: #{simple_cnn1layer_forward.1} parent=39 // pred_check
          %p1240 = pneg %p147
        $region42: #{simple_cnn1layer_forward.1} parent=39 // pred_check_branch
          %1242 = sbr.rel (%p1240) target = $region44
        $region43: #{simple_cnn1layer_forward.1} parent=39 // pred_region
          %s1244 = ssub.s32 16, 16
          %1245 = vsyncadd %s1237, %s1244
          %s1246 = smul.addr %s19, 16
          %s1247 = scalar_lea.hbm %s5, %s1246
          %s1249 = sshll.u32 %s1239, 4
          %s1250 = int_to_ptr.vmem [resolvable:$true] %s1249
          %1252 = dma.vmem_to_hbm [thread:$0]  %s1250, 16, %s1247, %s1237
        $region44: #{simple_cnn1layer_forward.1} parent=39 // pred_fallthru
          _
      $region40: #{simple_cnn1layer_forward.1} parent=5 // pred_fallthru
        _
      %p1253 = scmp.le.s32.totalorder 2, %s14
      // Predicated region
      $region45: #{simple_cnn1layer_forward.1} parent=5 // pred_check
        %p1254 = pneg %p1253
      $region46: #{simple_cnn1layer_forward.1} parent=5 // pred_check_branch
        %1256 = sbr.rel (%p1254) target = $region48
      $region47: #{simple_cnn1layer_forward.1} parent=5 // pred_region
        %s1257 = ssub.s32 %s14, 2
        // Predicated region
        $region49: #{simple_cnn1layer_forward.1} parent=47 // pred_check
          %p1258 = pneg %p153
        $region50: #{simple_cnn1layer_forward.1} parent=47 // pred_check_branch
          %1260 = sbr.rel (%p1258) target = $region52
        $region51: #{simple_cnn1layer_forward.1} parent=47 // pred_region
          %s1261 = sand.u32 %s138, 1
          %s1262 = scalar_lea.sflag [#allocation3], %s1261
          %s1263 = sand.u32 %s138, 1
          %s1264 = scalar_lea.vmem [#allocation2], %s1263
          %1265 = dma.done %s1262, 16
        $region52: #{simple_cnn1layer_forward.1} parent=47 // pred_fallthru
          _
      $region48: #{simple_cnn1layer_forward.1} parent=5 // pred_fallthru
        _
    $region6: #{simple_cnn1layer_forward.1} parent=1 // loop_footer
      %s18 = sadd.s32 1, %s14
    $region7: #{simple_cnn1layer_forward.1} parent=1 // loop_footer_branch
      %13 = sbr.rel target = $region3
    $region8: #{simple_cnn1layer_forward.1} parent=1 // loop_exit
      _
    %1266 = vsyncpa [#allocation3], 1
    %s1267 = scalar_lea.sflag [#allocation3], 1
    %1268 = vsyncpa %s1267, 1

</llo_original>
